<compile_context>
chip_gen: v7x
topology: tpu7x:2x2x1
jax: 0.10.0
libtpu: 0.0.40
codegen_flags: <defaults>
</compile_context>

<pallas_src>
import jax
import jax.numpy as jnp
from jax.experimental import pallas as pl
from jax.experimental.pallas import tpu as pltpu

# ---- tiny BERT config (synthetic) ------------------------------------------
B = 2            # batch
S = 8            # sequence length
H = 32           # hidden size
NH = 2           # attention heads
DH = H // NH     # head dim
I = 64           # intermediate (FFN) size
L = 2            # number of encoder layers
VOCAB = 50
MAX_POS = 16
LN_EPS = 1e-12
MASK_NEG = -1e9  # additive mask value for padded tokens
BS = B * S


# ---- shared helpers (used in-kernel and in the pure-JAX reference) -----------
def _layer_norm(x, gamma, beta):
    mu = jnp.mean(x, axis=-1, keepdims=True)
    var = jnp.mean((x - mu) * (x - mu), axis=-1, keepdims=True)
    return (x - mu) * jax.lax.rsqrt(var + LN_EPS) * gamma + beta


# ---- fused encoder kernel ----------------------------------------------------
def encoder_kernel(emb_ref, mask_ref, eg_ref, eb_ref,
                   wqkv_ref, bqkv_ref, wo_ref, bo_ref, g1_ref, be1_ref,
                   wf1_ref, bf1_ref, wf2_ref, bf2_ref, g2_ref, be2_ref,
                   out_ref, ctx_ref):
    # Embedding LayerNorm only on the first grid step; the VMEM-resident output
    # block (constant index_map over the "arbitrary" layer axis) carries the
    # activation across layers.
    @pl.when(pl.program_id(0) == 0)
    def _():
        e = emb_ref[...].astype(jnp.float32)                      # (B*S, H)
        out_ref[...] = _layer_norm(e, eg_ref[...], eb_ref[...])

    x = out_ref[...]                    # (B*S, H) f32 carried activation
    mask = mask_ref[...]                # (B, 1, S) additive mask

    # Fused QKV projection: single MXU push, 3*H-wide lane-dense output.
    qkv = jnp.dot(x.astype(jnp.bfloat16), wqkv_ref[...],
                  preferred_element_type=jnp.float32) + bqkv_ref[...]  # (B*S, 3H)

    scale = 1.0 / (DH ** 0.5)
    for h in range(NH):                 # NH == 2: static unroll, no concatenate
        lo = h * DH
        qh = qkv[:, lo:lo + DH].reshape(B, S, DH).astype(jnp.bfloat16)
        kh = qkv[:, H + lo:H + lo + DH].reshape(B, S, DH).astype(jnp.bfloat16)
        vh = qkv[:, 2 * H + lo:2 * H + lo + DH].reshape(B, S, DH).astype(jnp.bfloat16)
        s = jnp.einsum('bsd,btd->bst', qh, kh,
                       preferred_element_type=jnp.float32) * scale   # (B, S, S)
        s = s + mask
        s = s - jnp.max(s, axis=-1, keepdims=True)
        p = jnp.exp(s)
        p = p * pl.reciprocal(jnp.sum(p, axis=-1, keepdims=True), approx=True)
        ctx_h = jnp.einsum('bst,btd->bsd', p.astype(jnp.bfloat16), vh,
                           preferred_element_type=jnp.float32)       # (B, S, DH)
        # write head slice directly into the VMEM scratch -> no concat/relayout
        ctx_ref[:, lo:lo + DH] = ctx_h.reshape(BS, DH)

    attn = jnp.dot(ctx_ref[...].astype(jnp.bfloat16), wo_ref[...],
                   preferred_element_type=jnp.float32) + bo_ref[...]
    x1 = _layer_norm(x + attn, g1_ref[...], be1_ref[...])

    hid = jnp.dot(x1.astype(jnp.bfloat16), wf1_ref[...],
                  preferred_element_type=jnp.float32) + bf1_ref[...]
    # TODO(synk): HF BERT uses exact erf-GELU; tanh approximation used here.
    hid = jax.nn.gelu(hid, approximate=True)
    ffn = jnp.dot(hid.astype(jnp.bfloat16), wf2_ref[...],
                  preferred_element_type=jnp.float32) + bf2_ref[...]

    # carry to next layer / final HBM writeback happens once at grid end
    out_ref[...] = _layer_norm(x1 + ffn, g2_ref[...], be2_ref[...])


# ---- wrapper -----------------------------------------------------------------
def _full_spec(shape):
    n = len(shape)
    return pl.BlockSpec(shape, lambda l, _n=n: (0,) * _n)


def _per_layer_spec(shape):
    n = len(shape)
    return pl.BlockSpec((None,) + shape, lambda l, _n=n: (l,) + (0,) * _n)


def bert_encoder(emb2d, ext_mask, params):
    st = params['stacked']
    args = (emb2d, ext_mask, params['emb_g'], params['emb_b'],
            st['wqkv'], st['bqkv'], st['wo'], st['bo'], st['g1'], st['be1'],
            st['wf1'], st['bf1'], st['wf2'], st['bf2'], st['g2'], st['be2'])

    in_specs = [
        _full_spec((BS, H)),           # summed embeddings (2D)
        _full_spec((B, 1, S)),         # additive attention mask
        _full_spec((1, H)),            # embedding LN gamma
        _full_spec((1, H)),            # embedding LN beta
        _per_layer_spec((H, 3 * H)),   # fused QKV weight
        _per_layer_spec((1, 3 * H)),   # fused QKV bias
        _per_layer_spec((H, H)),       # attn output proj
        _per_layer_spec((1, H)),
        _per_layer_spec((1, H)),       # LN1 gamma
        _per_layer_spec((1, H)),       # LN1 beta
        _per_layer_spec((H, I)),       # FFN up
        _per_layer_spec((1, I)),
        _per_layer_spec((I, H)),       # FFN down
        _per_layer_spec((1, H)),
        _per_layer_spec((1, H)),       # LN2 gamma
        _per_layer_spec((1, H)),       # LN2 beta
    ]

    flops = L * (2 * BS * H * 3 * H                   # fused QKV
                 + 2 * NH * B * (2 * S * S * DH)      # scores + context
                 + 2 * BS * H * H                     # output projection
                 + 2 * BS * H * I + 2 * BS * I * H)   # FFN
    transcendentals = L * (B * NH * S * S + BS * I + B * NH * S + 2 * BS) + BS
    bytes_accessed = sum(int(a.size) * a.dtype.itemsize for a in args) + BS * H * 4
    cost = pl.CostEstimate(flops=int(flops),
                           transcendentals=int(transcendentals),
                           bytes_accessed=int(bytes_accessed))

    out2d = pl.pallas_call(
        encoder_kernel,
        out_shape=jax.ShapeDtypeStruct((BS, H), jnp.float32),
        grid_spec=pltpu.PrefetchScalarGridSpec(
            num_scalar_prefetch=0,
            grid=(L,),                                # layer axis, carried activation
            in_specs=in_specs,
            out_specs=pl.BlockSpec((BS, H), lambda l: (0, 0)),
            scratch_shapes=[pltpu.VMEM((BS, H), jnp.float32)],  # attention context
        ),
        compiler_params=pltpu.CompilerParams(
            dimension_semantics=("arbitrary",),
            vmem_limit_bytes=64 * 1024 * 1024),
        cost_estimate=cost,
    )(*args)
    return out2d.reshape(B, S, H)


def bert_feature_forward(input_ids, attention_mask, params):
    """Equivalent of bert_feature.forward (post-tokenization):
    returns (last_hidden_state, attention_mask)."""
    # TODO(synk): BertTokenizer + pretrained checkpoint loading have no Pallas
    # equivalent; inputs are token ids / mask, weights are synthetic.
    word = params['word_emb'][input_ids]                       # (B, S, H) gather (glue)
    pos = params['pos_emb'][jnp.arange(S)][None, :, :]         # (1, S, H)
    tok = params['type_emb'][0][None, None, :]                 # (1, 1, H) token_type_ids == 0
    emb2d = (word + pos + tok).reshape(BS, H)

    # extended additive attention mask: (1 - m) * large_negative  ->  (B, 1, S)
    ext_mask = (1.0 - attention_mask.astype(jnp.float32))[:, None, :] * MASK_NEG

    hidden = bert_encoder(emb2d, ext_mask, params)
    return hidden, attention_mask


# ---- pure-JAX reference (same math / same bf16 MXU operands) ------------------
def _ref_forward(input_ids, attention_mask, params):
    word = params['word_emb'][input_ids]
    pos = params['pos_emb'][jnp.arange(S)][None, :, :]
    tok = params['type_emb'][0][None, None, :]
    x = (word + pos + tok).reshape(BS, H)
    x = _layer_norm(x, params['emb_g'], params['emb_b'])
    mask = (1.0 - attention_mask.astype(jnp.float32))[:, None, :] * MASK_NEG
    st = params['stacked']
    for li in range(L):
        qkv = jnp.dot(x.astype(jnp.bfloat16), st['wqkv'][li],
                      preferred_element_type=jnp.float32) + st['bqkv'][li]
        ctx = []
        for h in range(NH):
            lo = h * DH
            qh = qkv[:, lo:lo + DH].reshape(B, S, DH).astype(jnp.bfloat16)
            kh = qkv[:, H + lo:H + lo + DH].reshape(B, S, DH).astype(jnp.bfloat16)
            vh = qkv[:, 2 * H + lo:2 * H + lo + DH].reshape(B, S, DH).astype(jnp.bfloat16)
            s = jnp.einsum('bsd,btd->bst', qh, kh,
                           preferred_element_type=jnp.float32) / (DH ** 0.5)
            p = jax.nn.softmax(s + mask, axis=-1)
            ctx.append(jnp.einsum('bst,btd->bsd', p.astype(jnp.bfloat16), vh,
                                  preferred_element_type=jnp.float32).reshape(BS, DH))
        ctx = jnp.concatenate(ctx, axis=-1)
        attn = jnp.dot(ctx.astype(jnp.bfloat16), st['wo'][li],
                       preferred_element_type=jnp.float32) + st['bo'][li]
        x1 = _layer_norm(x + attn, st['g1'][li], st['be1'][li])
        hid = jax.nn.gelu(jnp.dot(x1.astype(jnp.bfloat16), st['wf1'][li],
                                  preferred_element_type=jnp.float32) + st['bf1'][li],
                          approximate=True)
        ffn = jnp.dot(hid.astype(jnp.bfloat16), st['wf2'][li],
                      preferred_element_type=jnp.float32) + st['bf2'][li]
        x = _layer_norm(x1 + ffn, st['g2'][li], st['be2'][li])
    return x.reshape(B, S, H)


# ---- deterministic parameter init --------------------------------------------
def init_params(key):
    def nrm(k, shape, dtype=jnp.float32):
        return (0.02 * jax.random.normal(k, shape)).astype(dtype)

    keys = jax.random.split(key, 16)
    params = {
        'word_emb': nrm(keys[0], (VOCAB, H)),
        'pos_emb':  nrm(keys[1], (MAX_POS, H)),
        'type_emb': nrm(keys[2], (2, H)),
        'emb_g': (1.0 + 0.02 * jax.random.normal(keys[3], (1, H))).astype(jnp.float32),
        'emb_b': nrm(keys[4], (1, H)),
    }
    # Per-layer weights stacked along a leading L axis; MXU weights in bf16.
    params['stacked'] = {
        'wqkv': nrm(keys[5], (L, H, 3 * H), jnp.bfloat16),
        'bqkv': nrm(keys[6], (L, 1, 3 * H)),
        'wo':   nrm(keys[7], (L, H, H), jnp.bfloat16),
        'bo':   nrm(keys[8], (L, 1, H)),
        'g1':   (1.0 + 0.02 * jax.random.normal(keys[9], (L, 1, H))).astype(jnp.float32),
        'be1':  nrm(keys[10], (L, 1, H)),
        'wf1':  nrm(keys[11], (L, H, I), jnp.bfloat16),
        'bf1':  nrm(keys[12], (L, 1, I)),
        'wf2':  nrm(keys[13], (L, I, H), jnp.bfloat16),
        'bf2':  nrm(keys[14], (L, 1, H)),
        'g2':   (1.0 + 0.02 * jax.random.normal(keys[15], (L, 1, H))).astype(jnp.float32),
        'be2':  jnp.zeros((L, 1, H), jnp.float32),
    }
    return params


if __name__ == "__main__":
    key = jax.random.PRNGKey(0)
    k_param, k_ids = jax.random.split(key)
    params = init_params(k_param)

    input_ids = jax.random.randint(k_ids, (B, S), 0, VOCAB, dtype=jnp.int32)
    attention_mask = jnp.array(
        [[1, 1, 1, 1, 1, 1, 1, 1],
         [1, 1, 1, 1, 1, 1, 0, 0]], dtype=jnp.int32)   # second sample padded

    last_hidden, out_mask = bert_feature_forward(input_ids, attention_mask, params)
    last_hidden = jax.block_until_ready(last_hidden)

    ref = _ref_forward(input_ids, attention_mask, params)
    assert last_hidden.shape == (B, S, H)
    assert out_mask.shape == (B, S)
    max_err = float(jnp.max(jnp.abs(last_hidden - ref)))
    # tolerance covers the approx-reciprocal softmax; identical bf16 MXU math in both paths
    assert jnp.allclose(last_hidden, ref, rtol=5e-3, atol=5e-3), f"mismatch vs reference: {max_err}"

    print("KERNEL_OK")
</pallas_src>

<mosaic_0001>
module attributes {stable_mosaic.version = 11 : i64} {
  func.func @encoder_kernel(%arg0: i32, %arg1: memref<16x32xf32, #tpu.memory_space<vmem>>, %arg2: memref<2x1x8xf32, #tpu.memory_space<vmem>>, %arg3: memref<1x32xf32, #tpu.memory_space<vmem>>, %arg4: memref<1x32xf32, #tpu.memory_space<vmem>>, %arg5: memref<1x32x96xbf16, #tpu.memory_space<vmem>>, %arg6: memref<1x1x96xf32, #tpu.memory_space<vmem>>, %arg7: memref<1x32x32xbf16, #tpu.memory_space<vmem>>, %arg8: memref<1x1x32xf32, #tpu.memory_space<vmem>>, %arg9: memref<1x1x32xf32, #tpu.memory_space<vmem>>, %arg10: memref<1x1x32xf32, #tpu.memory_space<vmem>>, %arg11: memref<1x32x64xbf16, #tpu.memory_space<vmem>>, %arg12: memref<1x1x64xf32, #tpu.memory_space<vmem>>, %arg13: memref<1x64x32xbf16, #tpu.memory_space<vmem>>, %arg14: memref<1x1x32xf32, #tpu.memory_space<vmem>>, %arg15: memref<1x1x32xf32, #tpu.memory_space<vmem>>, %arg16: memref<1x1x32xf32, #tpu.memory_space<vmem>>, %arg17: memref<16x32xf32, #tpu.memory_space<vmem>>, %arg18: memref<16x32xf32, #tpu.memory_space<vmem>>) attributes {dimension_semantics = [#tpu.dimension_semantics<arbitrary>], iteration_bounds = array<i64: 2>, scalar_prefetch = 0 : i64, scratch_operands = 1 : i64, tpu.core_type = #tpu.core_type<tc>, window_params = [{pipeline_mode = #tpu.pipeline_mode<synchronous>, transform_indices = @transform_0, window_bounds = array<i64: 16, 32>}, {pipeline_mode = #tpu.pipeline_mode<synchronous>, transform_indices = @transform_1, window_bounds = array<i64: 2, 1, 8>}, {pipeline_mode = #tpu.pipeline_mode<synchronous>, transform_indices = @transform_2, window_bounds = array<i64: 1, 32>}, {pipeline_mode = #tpu.pipeline_mode<synchronous>, transform_indices = @transform_3, window_bounds = array<i64: 1, 32>}, {transform_indices = @transform_4, window_bounds = array<i64: 1, 32, 96>}, {transform_indices = @transform_5, window_bounds = array<i64: 1, 1, 96>}, {transform_indices = @transform_6, window_bounds = array<i64: 1, 32, 32>}, {transform_indices = @transform_7, window_bounds = array<i64: 1, 1, 32>}, {transform_indices = @transform_8, window_bounds = array<i64: 1, 1, 32>}, {transform_indices = @transform_9, window_bounds = array<i64: 1, 1, 32>}, {transform_indices = @transform_10, window_bounds = array<i64: 1, 32, 64>}, {transform_indices = @transform_11, window_bounds = array<i64: 1, 1, 64>}, {transform_indices = @transform_12, window_bounds = array<i64: 1, 64, 32>}, {transform_indices = @transform_13, window_bounds = array<i64: 1, 1, 32>}, {transform_indices = @transform_14, window_bounds = array<i64: 1, 1, 32>}, {transform_indices = @transform_15, window_bounds = array<i64: 1, 1, 32>}, {pipeline_mode = #tpu.pipeline_mode<synchronous>, transform_indices = @transform_16, window_bounds = array<i64: 16, 32>}]} {
    %c0_i32 = arith.constant 0 : i32
    %0 = arith.cmpi eq, %arg0, %c0_i32 : i32
    %1 = arith.extui %0 : i1 to i32
    %c0_i32_0 = arith.constant 0 : i32
    %2 = arith.cmpi ne, %1, %c0_i32_0 : i32
    scf.if %2 {
      %c0_75 = arith.constant 0 : index
      %c0_76 = arith.constant 0 : index
      %166 = vector.load %arg1[%c0_75, %c0_76] : memref<16x32xf32, #tpu.memory_space<vmem>>, vector<16x32xf32>
      %c0_77 = arith.constant 0 : index
      %c0_78 = arith.constant 0 : index
      %167 = vector.load %arg3[%c0_77, %c0_78] : memref<1x32xf32, #tpu.memory_space<vmem>>, vector<1x32xf32>
      %c0_79 = arith.constant 0 : index
      %c0_80 = arith.constant 0 : index
      %168 = vector.load %arg4[%c0_79, %c0_80] : memref<1x32xf32, #tpu.memory_space<vmem>>, vector<1x32xf32>
      %cst_81 = arith.constant dense<0.000000e+00> : vector<16xf32>
      %169 = vector.multi_reduction <add>, %166, %cst_81 [1] : vector<16x32xf32> to vector<16xf32>
      %170 = vector.shape_cast %169 : vector<16xf32> to vector<16x1xf32>
      %cst_82 = arith.constant 3.200000e+01 : f32
      %171 = vector.broadcast %cst_82 : f32 to vector<16x1xf32>
      %172 = arith.divf %170, %171 : vector<16x1xf32>
      %173 = vector.broadcast %172 : vector<16x1xf32> to vector<16x32xf32>
      %174 = arith.subf %166, %173 : vector<16x32xf32>
      %175 = vector.broadcast %172 : vector<16x1xf32> to vector<16x32xf32>
      %176 = arith.subf %166, %175 : vector<16x32xf32>
      %177 = arith.mulf %174, %176 : vector<16x32xf32>
      %cst_83 = arith.constant dense<0.000000e+00> : vector<16xf32>
      %178 = vector.multi_reduction <add>, %177, %cst_83 [1] : vector<16x32xf32> to vector<16xf32>
      %179 = vector.shape_cast %178 : vector<16xf32> to vector<16x1xf32>
      %cst_84 = arith.constant 3.200000e+01 : f32
      %180 = vector.broadcast %cst_84 : f32 to vector<16x1xf32>
      %181 = arith.divf %179, %180 : vector<16x1xf32>
      %182 = vector.broadcast %172 : vector<16x1xf32> to vector<16x32xf32>
      %183 = arith.subf %166, %182 : vector<16x32xf32>
      %cst_85 = arith.constant 9.99999996E-13 : f32
      %184 = vector.broadcast %cst_85 : f32 to vector<16x1xf32>
      %185 = arith.addf %181, %184 : vector<16x1xf32>
      %186 = math.rsqrt %185 : vector<16x1xf32>
      %187 = vector.broadcast %186 : vector<16x1xf32> to vector<16x32xf32>
      %188 = arith.mulf %183, %187 : vector<16x32xf32>
      %189 = vector.broadcast %167 : vector<1x32xf32> to vector<16x32xf32>
      %190 = arith.mulf %188, %189 : vector<16x32xf32>
      %191 = vector.broadcast %168 : vector<1x32xf32> to vector<16x32xf32>
      %192 = arith.addf %190, %191 : vector<16x32xf32>
      %c0_86 = arith.constant 0 : index
      %c0_87 = arith.constant 0 : index
      %193 = vector.load %arg17[%c0_86, %c0_87] : memref<16x32xf32, #tpu.memory_space<vmem>>, vector<16x32xf32>
      tpu.vector_store %arg17[%c0_86, %c0_87], %192 {strides = array<i32>} : memref<16x32xf32, #tpu.memory_space<vmem>>, vector<16x32xf32>,
    } else {
    }
    %c0 = arith.constant 0 : index
    %c0_1 = arith.constant 0 : index
    %3 = vector.load %arg17[%c0, %c0_1] : memref<16x32xf32, #tpu.memory_space<vmem>>, vector<16x32xf32>
    %c0_2 = arith.constant 0 : index
    %c0_3 = arith.constant 0 : index
    %c0_4 = arith.constant 0 : index
    %4 = vector.load %arg2[%c0_2, %c0_3, %c0_4] : memref<2x1x8xf32, #tpu.memory_space<vmem>>, vector<2x1x8xf32>
    %5 = arith.truncf %3 : vector<16x32xf32> to vector<16x32xbf16>
    %c0_5 = arith.constant 0 : index
    %c0_6 = arith.constant 0 : index
    %c0_7 = arith.constant 0 : index
    %6 = vector.load %arg5[%c0_5, %c0_6, %c0_7] : memref<1x32x96xbf16, #tpu.memory_space<vmem>>, vector<1x32x96xbf16>
    %7 = vector.shape_cast %6 : vector<1x32x96xbf16> to vector<32x96xbf16>
    %cst = arith.constant dense<0.000000e+00> : vector<16x96xf32>
    %8 = tpu.matmul %5, %7, %cst {dimension_numbers = #tpu.dot_dimension_numbers<[1], [0], [0], [1], [0, 0, 1, 1], [], []>} : vector<16x32xbf16>, vector<32x96xbf16>, vector<16x96xf32> -> vector<16x96xf32>
    %c0_8 = arith.constant 0 : index
    %c0_9 = arith.constant 0 : index
    %c0_10 = arith.constant 0 : index
    %9 = vector.load %arg6[%c0_8, %c0_9, %c0_10] : memref<1x1x96xf32, #tpu.memory_space<vmem>>, vector<1x1x96xf32>
    %10 = vector.shape_cast %9 : vector<1x1x96xf32> to vector<1x96xf32>
    %11 = vector.broadcast %10 : vector<1x96xf32> to vector<16x96xf32>
    %12 = arith.addf %8, %11 : vector<16x96xf32>
    %13 = vector.extract_strided_slice %12 {offsets = [0, 0], sizes = [16, 16], strides = [1, 1]} : vector<16x96xf32> to vector<16x16xf32>
    %14 = vector.shape_cast %13 : vector<16x16xf32> to vector<2x8x16xf32>
    %15 = arith.truncf %14 : vector<2x8x16xf32> to vector<2x8x16xbf16>
    %16 = vector.extract_strided_slice %12 {offsets = [0, 32], sizes = [16, 16], strides = [1, 1]} : vector<16x96xf32> to vector<16x16xf32>
    %17 = vector.shape_cast %16 : vector<16x16xf32> to vector<2x8x16xf32>
    %18 = arith.truncf %17 : vector<2x8x16xf32> to vector<2x8x16xbf16>
    %19 = vector.extract_strided_slice %12 {offsets = [0, 64], sizes = [16, 16], strides = [1, 1]} : vector<16x96xf32> to vector<16x16xf32>
    %20 = vector.shape_cast %19 : vector<16x16xf32> to vector<2x8x16xf32>
    %21 = arith.truncf %20 : vector<2x8x16xf32> to vector<2x8x16xbf16>
    "tpu.trace_start"() <{level = 10 : i32, message = "bsd,btd->bst"}> : () -> ()
    %cst_11 = arith.constant dense<0.000000e+00> : vector<2x8x8xf32>
    %22 = tpu.matmul %15, %18, %cst_11 {dimension_numbers = #tpu.dot_dimension_numbers<[2], [2], [1], [1], [0, 0, 0, 1, 1, 1], [0], [0]>} : vector<2x8x16xbf16>, vector<2x8x16xbf16>, vector<2x8x8xf32> -> vector<2x8x8xf32>
    "tpu.trace_stop"() : () -> ()
    %cst_12 = arith.constant 2.500000e-01 : f32
    %23 = vector.broadcast %cst_12 : f32 to vector<2x8x8xf32>
    %24 = arith.mulf %22, %23 : vector<2x8x8xf32>
    %25 = vector.broadcast %4 : vector<2x1x8xf32> to vector<2x8x8xf32>
    %26 = arith.addf %24, %25 : vector<2x8x8xf32>
    %cst_13 = arith.constant dense<0xFF800000> : vector<2x8xf32>
    %27 = vector.multi_reduction <maximumf>, %26, %cst_13 [2] : vector<2x8x8xf32> to vector<2x8xf32>
    %28 = vector.shape_cast %27 : vector<2x8xf32> to vector<2x8x1xf32>
    %29 = vector.broadcast %28 : vector<2x8x1xf32> to vector<2x8x8xf32>
    %30 = arith.subf %26, %29 : vector<2x8x8xf32>
    %31 = math.exp %30 : vector<2x8x8xf32>
    %cst_14 = arith.constant dense<0.000000e+00> : vector<2x8xf32>
    %32 = vector.multi_reduction <add>, %31, %cst_14 [2] : vector<2x8x8xf32> to vector<2x8xf32>
    %33 = vector.shape_cast %32 : vector<2x8xf32> to vector<2x8x1xf32>
    %34 = tpu.reciprocal %33 {approx = true} : vector<2x8x1xf32> -> vector<2x8x1xf32>
    %35 = vector.broadcast %34 : vector<2x8x1xf32> to vector<2x8x8xf32>
    %36 = arith.mulf %31, %35 : vector<2x8x8xf32>
    %37 = arith.truncf %36 : vector<2x8x8xf32> to vector<2x8x8xbf16>
    "tpu.trace_start"() <{level = 10 : i32, message = "bst,btd->bsd"}> : () -> ()
    %cst_15 = arith.constant dense<0.000000e+00> : vector<2x8x16xf32>
    %38 = tpu.matmul %37, %21, %cst_15 {dimension_numbers = #tpu.dot_dimension_numbers<[2], [1], [1], [2], [0, 0, 0, 1, 1, 2], [0], [0]>} : vector<2x8x8xbf16>, vector<2x8x16xbf16>, vector<2x8x16xf32> -> vector<2x8x16xf32>
    "tpu.trace_stop"() : () -> ()
    %39 = vector.shape_cast %38 : vector<2x8x16xf32> to vector<16x16xf32>
    %c0_16 = arith.constant 0 : index
    %c0_17 = arith.constant 0 : index
    %40 = vector.load %arg18[%c0_16, %c0_17] : memref<16x32xf32, #tpu.memory_space<vmem>>, vector<16x16xf32>
    tpu.vector_store %arg18[%c0_16, %c0_17], %39 {strides = array<i32>} : memref<16x32xf32, #tpu.memory_space<vmem>>, vector<16x16xf32>,
    %41 = vector.extract_strided_slice %12 {offsets = [0, 16], sizes = [16, 16], strides = [1, 1]} : vector<16x96xf32> to vector<16x16xf32>
    %42 = vector.shape_cast %41 : vector<16x16xf32> to vector<2x8x16xf32>
    %43 = arith.truncf %42 : vector<2x8x16xf32> to vector<2x8x16xbf16>
    %44 = vector.extract_strided_slice %12 {offsets = [0, 48], sizes = [16, 16], strides = [1, 1]} : vector<16x96xf32> to vector<16x16xf32>
    %45 = vector.shape_cast %44 : vector<16x16xf32> to vector<2x8x16xf32>
    %46 = arith.truncf %45 : vector<2x8x16xf32> to vector<2x8x16xbf16>
    %47 = vector.extract_strided_slice %12 {offsets = [0, 80], sizes = [16, 16], strides = [1, 1]} : vector<16x96xf32> to vector<16x16xf32>
    %48 = vector.shape_cast %47 : vector<16x16xf32> to vector<2x8x16xf32>
    %49 = arith.truncf %48 : vector<2x8x16xf32> to vector<2x8x16xbf16>
    "tpu.trace_start"() <{level = 10 : i32, message = "bsd,btd->bst"}> : () -> ()
    %cst_18 = arith.constant dense<0.000000e+00> : vector<2x8x8xf32>
    %50 = tpu.matmul %43, %46, %cst_18 {dimension_numbers = #tpu.dot_dimension_numbers<[2], [2], [1], [1], [0, 0, 0, 1, 1, 1], [0], [0]>} : vector<2x8x16xbf16>, vector<2x8x16xbf16>, vector<2x8x8xf32> -> vector<2x8x8xf32>
    "tpu.trace_stop"() : () -> ()
    %cst_19 = arith.constant 2.500000e-01 : f32
    %51 = vector.broadcast %cst_19 : f32 to vector<2x8x8xf32>
    %52 = arith.mulf %50, %51 : vector<2x8x8xf32>
    %53 = vector.broadcast %4 : vector<2x1x8xf32> to vector<2x8x8xf32>
    %54 = arith.addf %52, %53 : vector<2x8x8xf32>
    %cst_20 = arith.constant dense<0xFF800000> : vector<2x8xf32>
    %55 = vector.multi_reduction <maximumf>, %54, %cst_20 [2] : vector<2x8x8xf32> to vector<2x8xf32>
    %56 = vector.shape_cast %55 : vector<2x8xf32> to vector<2x8x1xf32>
    %57 = vector.broadcast %56 : vector<2x8x1xf32> to vector<2x8x8xf32>
    %58 = arith.subf %54, %57 : vector<2x8x8xf32>
    %59 = math.exp %58 : vector<2x8x8xf32>
    %cst_21 = arith.constant dense<0.000000e+00> : vector<2x8xf32>
    %60 = vector.multi_reduction <add>, %59, %cst_21 [2] : vector<2x8x8xf32> to vector<2x8xf32>
    %61 = vector.shape_cast %60 : vector<2x8xf32> to vector<2x8x1xf32>
    %62 = tpu.reciprocal %61 {approx = true} : vector<2x8x1xf32> -> vector<2x8x1xf32>
    %63 = vector.broadcast %62 : vector<2x8x1xf32> to vector<2x8x8xf32>
    %64 = arith.mulf %59, %63 : vector<2x8x8xf32>
    %65 = arith.truncf %64 : vector<2x8x8xf32> to vector<2x8x8xbf16>
    "tpu.trace_start"() <{level = 10 : i32, message = "bst,btd->bsd"}> : () -> ()
    %cst_22 = arith.constant dense<0.000000e+00> : vector<2x8x16xf32>
    %66 = tpu.matmul %65, %49, %cst_22 {dimension_numbers = #tpu.dot_dimension_numbers<[2], [1], [1], [2], [0, 0, 0, 1, 1, 2], [0], [0]>} : vector<2x8x8xbf16>, vector<2x8x16xbf16>, vector<2x8x16xf32> -> vector<2x8x16xf32>
    "tpu.trace_stop"() : () -> ()
    %67 = vector.shape_cast %66 : vector<2x8x16xf32> to vector<16x16xf32>
    %c0_23 = arith.constant 0 : index
    %c16 = arith.constant 16 : index
    %68 = vector.load %arg18[%c0_23, %c16] : memref<16x32xf32, #tpu.memory_space<vmem>>, vector<16x16xf32>
    tpu.vector_store %arg18[%c0_23, %c16], %67 {strides = array<i32>} : memref<16x32xf32, #tpu.memory_space<vmem>>, vector<16x16xf32>,
    %c0_24 = arith.constant 0 : index
    %c0_25 = arith.constant 0 : index
    %69 = vector.load %arg18[%c0_24, %c0_25] : memref<16x32xf32, #tpu.memory_space<vmem>>, vector<16x32xf32>
    %70 = arith.truncf %69 : vector<16x32xf32> to vector<16x32xbf16>
    %c0_26 = arith.constant 0 : index
    %c0_27 = arith.constant 0 : index
    %c0_28 = arith.constant 0 : index
    %71 = vector.load %arg7[%c0_26, %c0_27, %c0_28] : memref<1x32x32xbf16, #tpu.memory_space<vmem>>, vector<1x32x32xbf16>
    %72 = vector.shape_cast %71 : vector<1x32x32xbf16> to vector<32x32xbf16>
    %cst_29 = arith.constant dense<0.000000e+00> : vector<16x32xf32>
    %73 = tpu.matmul %70, %72, %cst_29 {dimension_numbers = #tpu.dot_dimension_numbers<[1], [0], [0], [1], [0, 0, 1, 1], [], []>} : vector<16x32xbf16>, vector<32x32xbf16>, vector<16x32xf32> -> vector<16x32xf32>
    %c0_30 = arith.constant 0 : index
    %c0_31 = arith.constant 0 : index
    %c0_32 = arith.constant 0 : index
    %74 = vector.load %arg8[%c0_30, %c0_31, %c0_32] : memref<1x1x32xf32, #tpu.memory_space<vmem>>, vector<1x1x32xf32>
    %75 = vector.shape_cast %74 : vector<1x1x32xf32> to vector<1x32xf32>
    %76 = vector.broadcast %75 : vector<1x32xf32> to vector<16x32xf32>
    %77 = arith.addf %73, %76 : vector<16x32xf32>
    %78 = arith.addf %3, %77 : vector<16x32xf32>
    %c0_33 = arith.constant 0 : index
    %c0_34 = arith.constant 0 : index
    %c0_35 = arith.constant 0 : index
    %79 = vector.load %arg9[%c0_33, %c0_34, %c0_35] : memref<1x1x32xf32, #tpu.memory_space<vmem>>, vector<1x1x32xf32>
    %80 = vector.shape_cast %79 : vector<1x1x32xf32> to vector<1x32xf32>
    %c0_36 = arith.constant 0 : index
    %c0_37 = arith.constant 0 : index
    %c0_38 = arith.constant 0 : index
    %81 = vector.load %arg10[%c0_36, %c0_37, %c0_38] : memref<1x1x32xf32, #tpu.memory_space<vmem>>, vector<1x1x32xf32>
    %82 = vector.shape_cast %81 : vector<1x1x32xf32> to vector<1x32xf32>
    %cst_39 = arith.constant dense<0.000000e+00> : vector<16xf32>
    %83 = vector.multi_reduction <add>, %78, %cst_39 [1] : vector<16x32xf32> to vector<16xf32>
    %84 = vector.shape_cast %83 : vector<16xf32> to vector<16x1xf32>
    %cst_40 = arith.constant 3.200000e+01 : f32
    %85 = vector.broadcast %cst_40 : f32 to vector<16x1xf32>
    %86 = arith.divf %84, %85 : vector<16x1xf32>
    %87 = vector.broadcast %86 : vector<16x1xf32> to vector<16x32xf32>
    %88 = arith.subf %78, %87 : vector<16x32xf32>
    %89 = vector.broadcast %86 : vector<16x1xf32> to vector<16x32xf32>
    %90 = arith.subf %78, %89 : vector<16x32xf32>
    %91 = arith.mulf %88, %90 : vector<16x32xf32>
    %cst_41 = arith.constant dense<0.000000e+00> : vector<16xf32>
    %92 = vector.multi_reduction <add>, %91, %cst_41 [1] : vector<16x32xf32> to vector<16xf32>
    %93 = vector.shape_cast %92 : vector<16xf32> to vector<16x1xf32>
    %cst_42 = arith.constant 3.200000e+01 : f32
    %94 = vector.broadcast %cst_42 : f32 to vector<16x1xf32>
    %95 = arith.divf %93, %94 : vector<16x1xf32>
    %96 = vector.broadcast %86 : vector<16x1xf32> to vector<16x32xf32>
    %97 = arith.subf %78, %96 : vector<16x32xf32>
    %cst_43 = arith.constant 9.99999996E-13 : f32
    %98 = vector.broadcast %cst_43 : f32 to vector<16x1xf32>
    %99 = arith.addf %95, %98 : vector<16x1xf32>
    %100 = math.rsqrt %99 : vector<16x1xf32>
    %101 = vector.broadcast %100 : vector<16x1xf32> to vector<16x32xf32>
    %102 = arith.mulf %97, %101 : vector<16x32xf32>
    %103 = vector.broadcast %80 : vector<1x32xf32> to vector<16x32xf32>
    %104 = arith.mulf %102, %103 : vector<16x32xf32>
    %105 = vector.broadcast %82 : vector<1x32xf32> to vector<16x32xf32>
    %106 = arith.addf %104, %105 : vector<16x32xf32>
    %107 = arith.truncf %106 : vector<16x32xf32> to vector<16x32xbf16>
    %c0_44 = arith.constant 0 : index
    %c0_45 = arith.constant 0 : index
    %c0_46 = arith.constant 0 : index
    %108 = vector.load %arg11[%c0_44, %c0_45, %c0_46] : memref<1x32x64xbf16, #tpu.memory_space<vmem>>, vector<1x32x64xbf16>
    %109 = vector.shape_cast %108 : vector<1x32x64xbf16> to vector<32x64xbf16>
    %cst_47 = arith.constant dense<0.000000e+00> : vector<16x64xf32>
    %110 = tpu.matmul %107, %109, %cst_47 {dimension_numbers = #tpu.dot_dimension_numbers<[1], [0], [0], [1], [0, 0, 1, 1], [], []>} : vector<16x32xbf16>, vector<32x64xbf16>, vector<16x64xf32> -> vector<16x64xf32>
    %c0_48 = arith.constant 0 : index
    %c0_49 = arith.constant 0 : index
    %c0_50 = arith.constant 0 : index
    %111 = vector.load %arg12[%c0_48, %c0_49, %c0_50] : memref<1x1x64xf32, #tpu.memory_space<vmem>>, vector<1x1x64xf32>
    %112 = vector.shape_cast %111 : vector<1x1x64xf32> to vector<1x64xf32>
    %113 = vector.broadcast %112 : vector<1x64xf32> to vector<16x64xf32>
    %114 = arith.addf %110, %113 : vector<16x64xf32>
    %115 = arith.mulf %114, %114 : vector<16x64xf32>
    %116 = arith.mulf %114, %115 : vector<16x64xf32>
    %cst_51 = arith.constant 4.471500e-02 : f32
    %117 = vector.broadcast %cst_51 : f32 to vector<16x64xf32>
    %118 = arith.mulf %117, %116 : vector<16x64xf32>
    %119 = arith.addf %114, %118 : vector<16x64xf32>
    %cst_52 = arith.constant 0.797884583 : f32
    %120 = vector.broadcast %cst_52 : f32 to vector<16x64xf32>
    %121 = arith.mulf %120, %119 : vector<16x64xf32>
    %122 = math.tanh %121 : vector<16x64xf32>
    %cst_53 = arith.constant 1.000000e+00 : f32
    %123 = vector.broadcast %cst_53 : f32 to vector<16x64xf32>
    %124 = arith.addf %123, %122 : vector<16x64xf32>
    %cst_54 = arith.constant 5.000000e-01 : f32
    %125 = vector.broadcast %cst_54 : f32 to vector<16x64xf32>
    %126 = arith.mulf %125, %124 : vector<16x64xf32>
    %127 = arith.mulf %114, %126 : vector<16x64xf32>
    %128 = arith.truncf %127 : vector<16x64xf32> to vector<16x64xbf16>
    %c0_55 = arith.constant 0 : index
    %c0_56 = arith.constant 0 : index
    %c0_57 = arith.constant 0 : index
    %129 = vector.load %arg13[%c0_55, %c0_56, %c0_57] : memref<1x64x32xbf16, #tpu.memory_space<vmem>>, vector<1x64x32xbf16>
    %130 = vector.shape_cast %129 : vector<1x64x32xbf16> to vector<64x32xbf16>
    %cst_58 = arith.constant dense<0.000000e+00> : vector<16x32xf32>
    %131 = tpu.matmul %128, %130, %cst_58 {dimension_numbers = #tpu.dot_dimension_numbers<[1], [0], [0], [1], [0, 0, 1, 1], [], []>} : vector<16x64xbf16>, vector<64x32xbf16>, vector<16x32xf32> -> vector<16x32xf32>
    %c0_59 = arith.constant 0 : index
    %c0_60 = arith.constant 0 : index
    %c0_61 = arith.constant 0 : index
    %132 = vector.load %arg14[%c0_59, %c0_60, %c0_61] : memref<1x1x32xf32, #tpu.memory_space<vmem>>, vector<1x1x32xf32>
    %133 = vector.shape_cast %132 : vector<1x1x32xf32> to vector<1x32xf32>
    %134 = vector.broadcast %133 : vector<1x32xf32> to vector<16x32xf32>
    %135 = arith.addf %131, %134 : vector<16x32xf32>
    %136 = arith.addf %106, %135 : vector<16x32xf32>
    %c0_62 = arith.constant 0 : index
    %c0_63 = arith.constant 0 : index
    %c0_64 = arith.constant 0 : index
    %137 = vector.load %arg15[%c0_62, %c0_63, %c0_64] : memref<1x1x32xf32, #tpu.memory_space<vmem>>, vector<1x1x32xf32>
    %138 = vector.shape_cast %137 : vector<1x1x32xf32> to vector<1x32xf32>
    %c0_65 = arith.constant 0 : index
    %c0_66 = arith.constant 0 : index
    %c0_67 = arith.constant 0 : index
    %139 = vector.load %arg16[%c0_65, %c0_66, %c0_67] : memref<1x1x32xf32, #tpu.memory_space<vmem>>, vector<1x1x32xf32>
    %140 = vector.shape_cast %139 : vector<1x1x32xf32> to vector<1x32xf32>
    %cst_68 = arith.constant dense<0.000000e+00> : vector<16xf32>
    %141 = vector.multi_reduction <add>, %136, %cst_68 [1] : vector<16x32xf32> to vector<16xf32>
    %142 = vector.shape_cast %141 : vector<16xf32> to vector<16x1xf32>
    %cst_69 = arith.constant 3.200000e+01 : f32
    %143 = vector.broadcast %cst_69 : f32 to vector<16x1xf32>
    %144 = arith.divf %142, %143 : vector<16x1xf32>
    %145 = vector.broadcast %144 : vector<16x1xf32> to vector<16x32xf32>
    %146 = arith.subf %136, %145 : vector<16x32xf32>
    %147 = vector.broadcast %144 : vector<16x1xf32> to vector<16x32xf32>
    %148 = arith.subf %136, %147 : vector<16x32xf32>
    %149 = arith.mulf %146, %148 : vector<16x32xf32>
    %cst_70 = arith.constant dense<0.000000e+00> : vector<16xf32>
    %150 = vector.multi_reduction <add>, %149, %cst_70 [1] : vector<16x32xf32> to vector<16xf32>
    %151 = vector.shape_cast %150 : vector<16xf32> to vector<16x1xf32>
    %cst_71 = arith.constant 3.200000e+01 : f32
    %152 = vector.broadcast %cst_71 : f32 to vector<16x1xf32>
    %153 = arith.divf %151, %152 : vector<16x1xf32>
    %154 = vector.broadcast %144 : vector<16x1xf32> to vector<16x32xf32>
    %155 = arith.subf %136, %154 : vector<16x32xf32>
    %cst_72 = arith.constant 9.99999996E-13 : f32
    %156 = vector.broadcast %cst_72 : f32 to vector<16x1xf32>
    %157 = arith.addf %153, %156 : vector<16x1xf32>
    %158 = math.rsqrt %157 : vector<16x1xf32>
    %159 = vector.broadcast %158 : vector<16x1xf32> to vector<16x32xf32>
    %160 = arith.mulf %155, %159 : vector<16x32xf32>
    %161 = vector.broadcast %138 : vector<1x32xf32> to vector<16x32xf32>
    %162 = arith.mulf %160, %161 : vector<16x32xf32>
    %163 = vector.broadcast %140 : vector<1x32xf32> to vector<16x32xf32>
    %164 = arith.addf %162, %163 : vector<16x32xf32>
    %c0_73 = arith.constant 0 : index
    %c0_74 = arith.constant 0 : index
    %165 = vector.load %arg17[%c0_73, %c0_74] : memref<16x32xf32, #tpu.memory_space<vmem>>, vector<16x32xf32>
    tpu.vector_store %arg17[%c0_73, %c0_74], %164 {strides = array<i32>} : memref<16x32xf32, #tpu.memory_space<vmem>>, vector<16x32xf32>,
    return
  }
  func.func @transform_0(%arg0: i32) -> (i32, i32) {
    %c0_i32 = arith.constant 0 : i32
    %c0_i32_0 = arith.constant 0 : i32
    %c0_i32_1 = arith.constant 0 : i32
    return %c0_i32, %c0_i32_0 : i32, i32
  }
  func.func @transform_1(%arg0: i32) -> (i32, i32, i32) {
    %c0_i32 = arith.constant 0 : i32
    %c0_i32_0 = arith.constant 0 : i32
    %c0_i32_1 = arith.constant 0 : i32
    %c0_i32_2 = arith.constant 0 : i32
    return %c0_i32, %c0_i32_0, %c0_i32_1 : i32, i32, i32
  }
  func.func @transform_2(%arg0: i32) -> (i32, i32) {
    %c0_i32 = arith.constant 0 : i32
    %c0_i32_0 = arith.constant 0 : i32
    %c0_i32_1 = arith.constant 0 : i32
    return %c0_i32, %c0_i32_0 : i32, i32
  }
  func.func @transform_3(%arg0: i32) -> (i32, i32) {
    %c0_i32 = arith.constant 0 : i32
    %c0_i32_0 = arith.constant 0 : i32
    %c0_i32_1 = arith.constant 0 : i32
    return %c0_i32, %c0_i32_0 : i32, i32
  }
  func.func @transform_4(%arg0: i32) -> (i32, i32, i32) {
    %c0_i32 = arith.constant 0 : i32
    %c0_i32_0 = arith.constant 0 : i32
    %c0_i32_1 = arith.constant 0 : i32
    return %arg0, %c0_i32, %c0_i32_0 : i32, i32, i32
  }
  func.func @transform_5(%arg0: i32) -> (i32, i32, i32) {
    %c0_i32 = arith.constant 0 : i32
    %c0_i32_0 = arith.constant 0 : i32
    %c0_i32_1 = arith.constant 0 : i32
    return %arg0, %c0_i32, %c0_i32_0 : i32, i32, i32
  }
  func.func @transform_6(%arg0: i32) -> (i32, i32, i32) {
    %c0_i32 = arith.constant 0 : i32
    %c0_i32_0 = arith.constant 0 : i32
    %c0_i32_1 = arith.constant 0 : i32
    return %arg0, %c0_i32, %c0_i32_0 : i32, i32, i32
  }
  func.func @transform_7(%arg0: i32) -> (i32, i32, i32) {
    %c0_i32 = arith.constant 0 : i32
    %c0_i32_0 = arith.constant 0 : i32
    %c0_i32_1 = arith.constant 0 : i32
    return %arg0, %c0_i32, %c0_i32_0 : i32, i32, i32
  }
  func.func @transform_8(%arg0: i32) -> (i32, i32, i32) {
    %c0_i32 = arith.constant 0 : i32
    %c0_i32_0 = arith.constant 0 : i32
    %c0_i32_1 = arith.constant 0 : i32
    return %arg0, %c0_i32, %c0_i32_0 : i32, i32, i32
  }
  func.func @transform_9(%arg0: i32) -> (i32, i32, i32) {
    %c0_i32 = arith.constant 0 : i32
    %c0_i32_0 = arith.constant 0 : i32
    %c0_i32_1 = arith.constant 0 : i32
    return %arg0, %c0_i32, %c0_i32_0 : i32, i32, i32
  }
  func.func @transform_10(%arg0: i32) -> (i32, i32, i32) {
    %c0_i32 = arith.constant 0 : i32
    %c0_i32_0 = arith.constant 0 : i32
    %c0_i32_1 = arith.constant 0 : i32
    return %arg0, %c0_i32, %c0_i32_0 : i32, i32, i32
  }
  func.func @transform_11(%arg0: i32) -> (i32, i32, i32) {
    %c0_i32 = arith.constant 0 : i32
    %c0_i32_0 = arith.constant 0 : i32
    %c0_i32_1 = arith.constant 0 : i32
    return %arg0, %c0_i32, %c0_i32_0 : i32, i32, i32
  }
  func.func @transform_12(%arg0: i32) -> (i32, i32, i32) {
    %c0_i32 = arith.constant 0 : i32
    %c0_i32_0 = arith.constant 0 : i32
    %c0_i32_1 = arith.constant 0 : i32
    return %arg0, %c0_i32, %c0_i32_0 : i32, i32, i32
  }
  func.func @transform_13(%arg0: i32) -> (i32, i32, i32) {
    %c0_i32 = arith.constant 0 : i32
    %c0_i32_0 = arith.constant 0 : i32
    %c0_i32_1 = arith.constant 0 : i32
    return %arg0, %c0_i32, %c0_i32_0 : i32, i32, i32
  }
  func.func @transform_14(%arg0: i32) -> (i32, i32, i32) {
    %c0_i32 = arith.constant 0 : i32
    %c0_i32_0 = arith.constant 0 : i32
    %c0_i32_1 = arith.constant 0 : i32
    return %arg0, %c0_i32, %c0_i32_0 : i32, i32, i32
  }
  func.func @transform_15(%arg0: i32) -> (i32, i32, i32) {
    %c0_i32 = arith.constant 0 : i32
    %c0_i32_0 = arith.constant 0 : i32
    %c0_i32_1 = arith.constant 0 : i32
    return %arg0, %c0_i32, %c0_i32_0 : i32, i32, i32
  }
  func.func @transform_16(%arg0: i32) -> (i32, i32) {
    %c0_i32 = arith.constant 0 : i32
    %c0_i32_0 = arith.constant 0 : i32
    %c0_i32_1 = arith.constant 0 : i32
    return %c0_i32, %c0_i32_0 : i32, i32
  }
}

</mosaic_0001>

<llo_original>
// kernel: tpu_custom_call.1
$region0: #{tpu_custom_call.1}
  #allocation0 [shape = 'u32[]', space=smem, size = 0x4, offset = 0x4, fixed_abs, tag = 'smem constant byte address 0x4 - core index']
  #allocation1 [shape = 'u32[144,128]{1,0:T(1,128)}', space=vmem, size = 0x12000, scoped, tag = 'internal scratch']
  #allocation2 [shape = 'f32[16,32]{1,0:T(8,128)}', space=vmem, size = 0x2000, scoped, tag = 'scratch operand']
  %s0 = inlined_call_operand.hbm [shape: f32[16,32], index: 0, kind: input, shape index: {}]
  %s1 = inlined_call_operand.hbm [shape: f32[2,1,8], index: 1, kind: input, shape index: {}]
  %s2 = inlined_call_operand.hbm [shape: f32[1,32], index: 2, kind: input, shape index: {}]
  %s3 = inlined_call_operand.hbm [shape: f32[1,32], index: 3, kind: input, shape index: {}]
  %s4 = inlined_call_operand.hbm [shape: bf16[2,32,96], index: 4, kind: input, shape index: {}]
  %s5 = inlined_call_operand.hbm [shape: f32[2,1,96], index: 5, kind: input, shape index: {}]
  %s6 = inlined_call_operand.hbm [shape: bf16[2,32,32], index: 6, kind: input, shape index: {}]
  %s7 = inlined_call_operand.hbm [shape: f32[2,1,32], index: 7, kind: input, shape index: {}]
  %s8 = inlined_call_operand.hbm [shape: f32[2,1,32], index: 8, kind: input, shape index: {}]
  %s9 = inlined_call_operand.hbm [shape: f32[2,1,32], index: 9, kind: input, shape index: {}]
  %s10 = inlined_call_operand.hbm [shape: bf16[2,32,64], index: 10, kind: input, shape index: {}]
  %s11 = inlined_call_operand.hbm [shape: f32[2,1,64], index: 11, kind: input, shape index: {}]
  %s12 = inlined_call_operand.hbm [shape: bf16[2,64,32], index: 12, kind: input, shape index: {}]
  %s13 = inlined_call_operand.hbm [shape: f32[2,1,32], index: 13, kind: input, shape index: {}]
  %s14 = inlined_call_operand.hbm [shape: f32[2,1,32], index: 14, kind: input, shape index: {}]
  %s15 = inlined_call_operand.hbm [shape: f32[2,1,32], index: 15, kind: input, shape index: {}]
  %s16 = inlined_call_operand.hbm [shape: f32[16,32], index: 16, kind: output, shape index: {}]
  %s17 = sld [smem:[#allocation0]]
  $region165: #{tpu_custom_call.1} parent=0
    _
  %s19 = ssub.s32 1, %s17
  %s20 = scalar_select 0, %s19, %s17
  $region1: #{tpu_custom_call.1} parent=0
    #allocation3 [shape = 'u8[8192]{0}', space=vmem, size = 0x2000, scoped, tag = 'input window, operand 0, single buffered']
    #allocation4 [shape = 's32[2]{0}', space=sflag, size = 0x8, scoped, tag = 'scoped memory for tpu_custom_call.1']
    #allocation5 [shape = 's32[2]{0}', space=sflag, size = 0x8, scoped, tag = 'scoped memory for tpu_custom_call.1']
    #allocation6 [shape = 'u8[1024]{0}', space=vmem, size = 0x400, scoped, tag = 'input window, operand 1, single buffered']
    #allocation7 [shape = 's32[1]{0}', space=sflag, size = 0x4, scoped, tag = 'scoped memory for tpu_custom_call.1']
    #allocation8 [shape = 'u8[512]{0}', space=vmem, size = 0x400, scoped, tag = 'input window, operand 2, single buffered']
    #allocation9 [shape = 'u8[512]{0}', space=vmem, size = 0x400, scoped, tag = 'input window, operand 3, single buffered']
    #allocation10 [shape = 's32[1]{0}', space=sflag, size = 0x4, scoped, tag = 'scoped memory for tpu_custom_call.1']
    #allocation11 [shape = 'u8[16384]{0}', space=vmem, size = 0x4000, scoped, tag = 'input window, operand 4']
    #allocation12 [shape = 'u8[1024]{0}', space=vmem, size = 0x400, scoped, tag = 'input window, operand 5']
    #allocation13 [shape = 'u8[16384]{0}', space=vmem, size = 0x4000, scoped, tag = 'input window, operand 6']
    #allocation14 [shape = 'u8[1024]{0}', space=vmem, size = 0x400, scoped, tag = 'input window, operand 7']
    #allocation15 [shape = 'u8[1024]{0}', space=vmem, size = 0x400, scoped, tag = 'input window, operand 8']
    #allocation16 [shape = 'u8[1024]{0}', space=vmem, size = 0x400, scoped, tag = 'input window, operand 9']
    #allocation17 [shape = 'u8[16384]{0}', space=vmem, size = 0x4000, scoped, tag = 'input window, operand 10']
    #allocation18 [shape = 'u8[1024]{0}', space=vmem, size = 0x400, scoped, tag = 'input window, operand 11']
    #allocation19 [shape = 'u8[32768]{0}', space=vmem, size = 0x8000, scoped, tag = 'input window, operand 12']
    #allocation20 [shape = 'u8[1024]{0}', space=vmem, size = 0x400, scoped, tag = 'input window, operand 13']
    #allocation21 [shape = 'u8[1024]{0}', space=vmem, size = 0x400, scoped, tag = 'input window, operand 14']
    #allocation22 [shape = 'u8[1024]{0}', space=vmem, size = 0x400, scoped, tag = 'input window, operand 15']
    #allocation23 [shape = 'u8[8192]{0}', space=vmem, size = 0x2000, scoped, tag = 'output window, operand 0, single buffered']
    %21 = vsyncpa [#allocation4], 0
    %22 = vsyncpa [#allocation7], 0
    %23 = vsyncpa [#allocation10], 0
    %24 = vsyncpa [#allocation5], 0
    loop: start=0, step=1, limit=4
    $region2: #{tpu_custom_call.1} parent=1 // loop_pre_header
      _
    $region3: #{tpu_custom_call.1} parent=1 // loop_header
      %s26 = sphi 0, %s30
      %p27 = scmp.ge.s32.totalorder %s26, 4
      %s34 = sphi 0, %s34
      %s36 = sphi 0, %s34
      %s37 = sphi 0, %s36
      %s51 = sphi 0, %s37
      %s55 = sphi 0, %s55
      %s57 = sphi 0, %s55
      %s58 = sphi 0, %s57
      %s72 = sphi 0, %s58
      %s76 = sphi 0, %s76
      %s78 = sphi 0, %s76
      %s79 = sphi 0, %s78
      %s93 = sphi 0, %s79
      %s97 = sphi 0, %s97
      %s99 = sphi 0, %s97
      %s100 = sphi 0, %s99
      %s114 = sphi 0, %s100
      %s120 = sphi 0, %s122
      %s123 = sphi 0, %s120
      %s124 = sphi 0, %s123
      %s140 = sphi 0, %s124
      %s146 = sphi 0, %s148
      %s149 = sphi 0, %s146
      %s150 = sphi 0, %s149
      %s166 = sphi 0, %s150
      %s172 = sphi 0, %s174
      %s175 = sphi 0, %s172
      %s176 = sphi 0, %s175
      %s192 = sphi 0, %s176
      %s198 = sphi 0, %s200
      %s201 = sphi 0, %s198
      %s202 = sphi 0, %s201
      %s218 = sphi 0, %s202
      %s224 = sphi 0, %s226
      %s227 = sphi 0, %s224
      %s228 = sphi 0, %s227
      %s244 = sphi 0, %s228
      %s250 = sphi 0, %s252
      %s253 = sphi 0, %s250
      %s254 = sphi 0, %s253
      %s270 = sphi 0, %s254
      %s276 = sphi 0, %s278
      %s279 = sphi 0, %s276
      %s280 = sphi 0, %s279
      %s296 = sphi 0, %s280
      %s302 = sphi 0, %s304
      %s305 = sphi 0, %s302
      %s306 = sphi 0, %s305
      %s322 = sphi 0, %s306
      %s328 = sphi 0, %s330
      %s331 = sphi 0, %s328
      %s332 = sphi 0, %s331
      %s348 = sphi 0, %s332
      %s354 = sphi 0, %s356
      %s357 = sphi 0, %s354
      %s358 = sphi 0, %s357
      %s374 = sphi 0, %s358
      %s380 = sphi 0, %s382
      %s383 = sphi 0, %s380
      %s384 = sphi 0, %s383
      %s400 = sphi 0, %s384
      %s406 = sphi 0, %s408
      %s409 = sphi 0, %s406
      %s410 = sphi 0, %s409
      %s426 = sphi 0, %s410
      %s430 = sphi 0, %s430
      %s432 = sphi 0, %s430
      %s433 = sphi 0, %s432
      %s447 = sphi 0, %s433
    $region4: #{tpu_custom_call.1} parent=1 // loop_header_branch
      %29 = sbr.rel (%p27) target = $region8
    $region5: #{tpu_custom_call.1} parent=1 // loop_body
      %s31 = ssub.s32 %s26, 1
      %s32 = ssub.s32 %s26, 2
      %s33 = sadd.s32 %s26, 1
      %s35 = sadd.s32 %s34, 1
      %p38 = scmp.eq.s32.totalorder %s26, 1
      %p39 = scmp.ne.s32.totalorder %s34, %s36
      %p40 = scmp.eq.s32.totalorder %s26, 0
      %p41 = por %p39, %p40
      %p42 = scmp.ne.s32.totalorder %s34, %s36
      %p43 = scmp.eq.s32.totalorder %s31, 1
      %p44 = por %p42, %p43
      %p45 = scmp.ne.s32.totalorder %s36, %s37
      %p46 = scmp.eq.s32.totalorder %s31, 0
      %p47 = por %p45, %p46
      %p48 = scmp.ne.s32.totalorder %s36, %s37
      %p49 = scmp.eq.s32.totalorder %s32, 1
      %p50 = por %p48, %p49
      %p52 = scmp.ne.s32.totalorder %s37, %s51
      %p53 = scmp.eq.s32.totalorder %s32, 0
      %p54 = por %p52, %p53
      %s56 = sadd.s32 %s55, 1
      %p59 = scmp.eq.s32.totalorder %s26, 1
      %p60 = scmp.ne.s32.totalorder %s55, %s57
      %p61 = scmp.eq.s32.totalorder %s26, 0
      %p62 = por %p60, %p61
      %p63 = scmp.ne.s32.totalorder %s55, %s57
      %p64 = scmp.eq.s32.totalorder %s31, 1
      %p65 = por %p63, %p64
      %p66 = scmp.ne.s32.totalorder %s57, %s58
      %p67 = scmp.eq.s32.totalorder %s31, 0
      %p68 = por %p66, %p67
      %p69 = scmp.ne.s32.totalorder %s57, %s58
      %p70 = scmp.eq.s32.totalorder %s32, 1
      %p71 = por %p69, %p70
      %p73 = scmp.ne.s32.totalorder %s58, %s72
      %p74 = scmp.eq.s32.totalorder %s32, 0
      %p75 = por %p73, %p74
      %s77 = sadd.s32 %s76, 1
      %p80 = scmp.eq.s32.totalorder %s26, 1
      %p81 = scmp.ne.s32.totalorder %s76, %s78
      %p82 = scmp.eq.s32.totalorder %s26, 0
      %p83 = por %p81, %p82
      %p84 = scmp.ne.s32.totalorder %s76, %s78
      %p85 = scmp.eq.s32.totalorder %s31, 1
      %p86 = por %p84, %p85
      %p87 = scmp.ne.s32.totalorder %s78, %s79
      %p88 = scmp.eq.s32.totalorder %s31, 0
      %p89 = por %p87, %p88
      %p90 = scmp.ne.s32.totalorder %s78, %s79
      %p91 = scmp.eq.s32.totalorder %s32, 1
      %p92 = por %p90, %p91
      %p94 = scmp.ne.s32.totalorder %s79, %s93
      %p95 = scmp.eq.s32.totalorder %s32, 0
      %p96 = por %p94, %p95
      %s98 = sadd.s32 %s97, 1
      %p101 = scmp.eq.s32.totalorder %s26, 1
      %p102 = scmp.ne.s32.totalorder %s97, %s99
      %p103 = scmp.eq.s32.totalorder %s26, 0
      %p104 = por %p102, %p103
      %p105 = scmp.ne.s32.totalorder %s97, %s99
      %p106 = scmp.eq.s32.totalorder %s31, 1
      %p107 = por %p105, %p106
      %p108 = scmp.ne.s32.totalorder %s99, %s100
      %p109 = scmp.eq.s32.totalorder %s31, 0
      %p110 = por %p108, %p109
      %p111 = scmp.ne.s32.totalorder %s99, %s100
      %p112 = scmp.eq.s32.totalorder %s32, 1
      %p113 = por %p111, %p112
      %p115 = scmp.ne.s32.totalorder %s100, %s114
      %p116 = scmp.eq.s32.totalorder %s32, 0
      %p117 = por %p115, %p116
      %s118 = ssub.s32 %s26, %s33
      %p119 = scmp.eq.s32.totalorder %s118, 0
      %s121 = sadd.s32 %s120, 1
      %s122 = scalar_select %p119, %s120, %s121
      %p125 = pneg %p119
      %p126 = scmp.eq.s32.totalorder %s26, 1
      %p127 = por %p125, %p126
      %p128 = scmp.ne.s32.totalorder %s120, %s123
      %p129 = scmp.eq.s32.totalorder %s26, 0
      %p130 = por %p128, %p129
      %p131 = scmp.ne.s32.totalorder %s120, %s123
      %p132 = scmp.eq.s32.totalorder %s31, 1
      %p133 = por %p131, %p132
      %p134 = scmp.ne.s32.totalorder %s123, %s124
      %p135 = scmp.eq.s32.totalorder %s31, 0
      %p136 = por %p134, %p135
      %p137 = scmp.ne.s32.totalorder %s123, %s124
      %p138 = scmp.eq.s32.totalorder %s32, 1
      %p139 = por %p137, %p138
      %p141 = scmp.ne.s32.totalorder %s124, %s140
      %p142 = scmp.eq.s32.totalorder %s32, 0
      %p143 = por %p141, %p142
      %s144 = ssub.s32 %s26, %s33
      %p145 = scmp.eq.s32.totalorder %s144, 0
      %s147 = sadd.s32 %s146, 1
      %s148 = scalar_select %p145, %s146, %s147
      %p151 = pneg %p145
      %p152 = scmp.eq.s32.totalorder %s26, 1
      %p153 = por %p151, %p152
      %p154 = scmp.ne.s32.totalorder %s146, %s149
      %p155 = scmp.eq.s32.totalorder %s26, 0
      %p156 = por %p154, %p155
      %p157 = scmp.ne.s32.totalorder %s146, %s149
      %p158 = scmp.eq.s32.totalorder %s31, 1
      %p159 = por %p157, %p158
      %p160 = scmp.ne.s32.totalorder %s149, %s150
      %p161 = scmp.eq.s32.totalorder %s31, 0
      %p162 = por %p160, %p161
      %p163 = scmp.ne.s32.totalorder %s149, %s150
      %p164 = scmp.eq.s32.totalorder %s32, 1
      %p165 = por %p163, %p164
      %p167 = scmp.ne.s32.totalorder %s150, %s166
      %p168 = scmp.eq.s32.totalorder %s32, 0
      %p169 = por %p167, %p168
      %s170 = ssub.s32 %s26, %s33
      %p171 = scmp.eq.s32.totalorder %s170, 0
      %s173 = sadd.s32 %s172, 1
      %s174 = scalar_select %p171, %s172, %s173
      %p177 = pneg %p171
      %p178 = scmp.eq.s32.totalorder %s26, 1
      %p179 = por %p177, %p178
      %p180 = scmp.ne.s32.totalorder %s172, %s175
      %p181 = scmp.eq.s32.totalorder %s26, 0
      %p182 = por %p180, %p181
      %p183 = scmp.ne.s32.totalorder %s172, %s175
      %p184 = scmp.eq.s32.totalorder %s31, 1
      %p185 = por %p183, %p184
      %p186 = scmp.ne.s32.totalorder %s175, %s176
      %p187 = scmp.eq.s32.totalorder %s31, 0
      %p188 = por %p186, %p187
      %p189 = scmp.ne.s32.totalorder %s175, %s176
      %p190 = scmp.eq.s32.totalorder %s32, 1
      %p191 = por %p189, %p190
      %p193 = scmp.ne.s32.totalorder %s176, %s192
      %p194 = scmp.eq.s32.totalorder %s32, 0
      %p195 = por %p193, %p194
      %s196 = ssub.s32 %s26, %s33
      %p197 = scmp.eq.s32.totalorder %s196, 0
      %s199 = sadd.s32 %s198, 1
      %s200 = scalar_select %p197, %s198, %s199
      %p203 = pneg %p197
      %p204 = scmp.eq.s32.totalorder %s26, 1
      %p205 = por %p203, %p204
      %p206 = scmp.ne.s32.totalorder %s198, %s201
      %p207 = scmp.eq.s32.totalorder %s26, 0
      %p208 = por %p206, %p207
      %p209 = scmp.ne.s32.totalorder %s198, %s201
      %p210 = scmp.eq.s32.totalorder %s31, 1
      %p211 = por %p209, %p210
      %p212 = scmp.ne.s32.totalorder %s201, %s202
      %p213 = scmp.eq.s32.totalorder %s31, 0
      %p214 = por %p212, %p213
      %p215 = scmp.ne.s32.totalorder %s201, %s202
      %p216 = scmp.eq.s32.totalorder %s32, 1
      %p217 = por %p215, %p216
      %p219 = scmp.ne.s32.totalorder %s202, %s218
      %p220 = scmp.eq.s32.totalorder %s32, 0
      %p221 = por %p219, %p220
      %s222 = ssub.s32 %s26, %s33
      %p223 = scmp.eq.s32.totalorder %s222, 0
      %s225 = sadd.s32 %s224, 1
      %s226 = scalar_select %p223, %s224, %s225
      %p229 = pneg %p223
      %p230 = scmp.eq.s32.totalorder %s26, 1
      %p231 = por %p229, %p230
      %p232 = scmp.ne.s32.totalorder %s224, %s227
      %p233 = scmp.eq.s32.totalorder %s26, 0
      %p234 = por %p232, %p233
      %p235 = scmp.ne.s32.totalorder %s224, %s227
      %p236 = scmp.eq.s32.totalorder %s31, 1
      %p237 = por %p235, %p236
      %p238 = scmp.ne.s32.totalorder %s227, %s228
      %p239 = scmp.eq.s32.totalorder %s31, 0
      %p240 = por %p238, %p239
      %p241 = scmp.ne.s32.totalorder %s227, %s228
      %p242 = scmp.eq.s32.totalorder %s32, 1
      %p243 = por %p241, %p242
      %p245 = scmp.ne.s32.totalorder %s228, %s244
      %p246 = scmp.eq.s32.totalorder %s32, 0
      %p247 = por %p245, %p246
      %s248 = ssub.s32 %s26, %s33
      %p249 = scmp.eq.s32.totalorder %s248, 0
      %s251 = sadd.s32 %s250, 1
      %s252 = scalar_select %p249, %s250, %s251
      %p255 = pneg %p249
      %p256 = scmp.eq.s32.totalorder %s26, 1
      %p257 = por %p255, %p256
      %p258 = scmp.ne.s32.totalorder %s250, %s253
      %p259 = scmp.eq.s32.totalorder %s26, 0
      %p260 = por %p258, %p259
      %p261 = scmp.ne.s32.totalorder %s250, %s253
      %p262 = scmp.eq.s32.totalorder %s31, 1
      %p263 = por %p261, %p262
      %p264 = scmp.ne.s32.totalorder %s253, %s254
      %p265 = scmp.eq.s32.totalorder %s31, 0
      %p266 = por %p264, %p265
      %p267 = scmp.ne.s32.totalorder %s253, %s254
      %p268 = scmp.eq.s32.totalorder %s32, 1
      %p269 = por %p267, %p268
      %p271 = scmp.ne.s32.totalorder %s254, %s270
      %p272 = scmp.eq.s32.totalorder %s32, 0
      %p273 = por %p271, %p272
      %s274 = ssub.s32 %s26, %s33
      %p275 = scmp.eq.s32.totalorder %s274, 0
      %s277 = sadd.s32 %s276, 1
      %s278 = scalar_select %p275, %s276, %s277
      %p281 = pneg %p275
      %p282 = scmp.eq.s32.totalorder %s26, 1
      %p283 = por %p281, %p282
      %p284 = scmp.ne.s32.totalorder %s276, %s279
      %p285 = scmp.eq.s32.totalorder %s26, 0
      %p286 = por %p284, %p285
      %p287 = scmp.ne.s32.totalorder %s276, %s279
      %p288 = scmp.eq.s32.totalorder %s31, 1
      %p289 = por %p287, %p288
      %p290 = scmp.ne.s32.totalorder %s279, %s280
      %p291 = scmp.eq.s32.totalorder %s31, 0
      %p292 = por %p290, %p291
      %p293 = scmp.ne.s32.totalorder %s279, %s280
      %p294 = scmp.eq.s32.totalorder %s32, 1
      %p295 = por %p293, %p294
      %p297 = scmp.ne.s32.totalorder %s280, %s296
      %p298 = scmp.eq.s32.totalorder %s32, 0
      %p299 = por %p297, %p298
      %s300 = ssub.s32 %s26, %s33
      %p301 = scmp.eq.s32.totalorder %s300, 0
      %s303 = sadd.s32 %s302, 1
      %s304 = scalar_select %p301, %s302, %s303
      %p307 = pneg %p301
      %p308 = scmp.eq.s32.totalorder %s26, 1
      %p309 = por %p307, %p308
      %p310 = scmp.ne.s32.totalorder %s302, %s305
      %p311 = scmp.eq.s32.totalorder %s26, 0
      %p312 = por %p310, %p311
      %p313 = scmp.ne.s32.totalorder %s302, %s305
      %p314 = scmp.eq.s32.totalorder %s31, 1
      %p315 = por %p313, %p314
      %p316 = scmp.ne.s32.totalorder %s305, %s306
      %p317 = scmp.eq.s32.totalorder %s31, 0
      %p318 = por %p316, %p317
      %p319 = scmp.ne.s32.totalorder %s305, %s306
      %p320 = scmp.eq.s32.totalorder %s32, 1
      %p321 = por %p319, %p320
      %p323 = scmp.ne.s32.totalorder %s306, %s322
      %p324 = scmp.eq.s32.totalorder %s32, 0
      %p325 = por %p323, %p324
      %s326 = ssub.s32 %s26, %s33
      %p327 = scmp.eq.s32.totalorder %s326, 0
      %s329 = sadd.s32 %s328, 1
      %s330 = scalar_select %p327, %s328, %s329
      %p333 = pneg %p327
      %p334 = scmp.eq.s32.totalorder %s26, 1
      %p335 = por %p333, %p334
      %p336 = scmp.ne.s32.totalorder %s328, %s331
      %p337 = scmp.eq.s32.totalorder %s26, 0
      %p338 = por %p336, %p337
      %p339 = scmp.ne.s32.totalorder %s328, %s331
      %p340 = scmp.eq.s32.totalorder %s31, 1
      %p341 = por %p339, %p340
      %p342 = scmp.ne.s32.totalorder %s331, %s332
      %p343 = scmp.eq.s32.totalorder %s31, 0
      %p344 = por %p342, %p343
      %p345 = scmp.ne.s32.totalorder %s331, %s332
      %p346 = scmp.eq.s32.totalorder %s32, 1
      %p347 = por %p345, %p346
      %p349 = scmp.ne.s32.totalorder %s332, %s348
      %p350 = scmp.eq.s32.totalorder %s32, 0
      %p351 = por %p349, %p350
      %s352 = ssub.s32 %s26, %s33
      %p353 = scmp.eq.s32.totalorder %s352, 0
      %s355 = sadd.s32 %s354, 1
      %s356 = scalar_select %p353, %s354, %s355
      %p359 = pneg %p353
      %p360 = scmp.eq.s32.totalorder %s26, 1
      %p361 = por %p359, %p360
      %p362 = scmp.ne.s32.totalorder %s354, %s357
      %p363 = scmp.eq.s32.totalorder %s26, 0
      %p364 = por %p362, %p363
      %p365 = scmp.ne.s32.totalorder %s354, %s357
      %p366 = scmp.eq.s32.totalorder %s31, 1
      %p367 = por %p365, %p366
      %p368 = scmp.ne.s32.totalorder %s357, %s358
      %p369 = scmp.eq.s32.totalorder %s31, 0
      %p370 = por %p368, %p369
      %p371 = scmp.ne.s32.totalorder %s357, %s358
      %p372 = scmp.eq.s32.totalorder %s32, 1
      %p373 = por %p371, %p372
      %p375 = scmp.ne.s32.totalorder %s358, %s374
      %p376 = scmp.eq.s32.totalorder %s32, 0
      %p377 = por %p375, %p376
      %s378 = ssub.s32 %s26, %s33
      %p379 = scmp.eq.s32.totalorder %s378, 0
      %s381 = sadd.s32 %s380, 1
      %s382 = scalar_select %p379, %s380, %s381
      %p385 = pneg %p379
      %p386 = scmp.eq.s32.totalorder %s26, 1
      %p387 = por %p385, %p386
      %p388 = scmp.ne.s32.totalorder %s380, %s383
      %p389 = scmp.eq.s32.totalorder %s26, 0
      %p390 = por %p388, %p389
      %p391 = scmp.ne.s32.totalorder %s380, %s383
      %p392 = scmp.eq.s32.totalorder %s31, 1
      %p393 = por %p391, %p392
      %p394 = scmp.ne.s32.totalorder %s383, %s384
      %p395 = scmp.eq.s32.totalorder %s31, 0
      %p396 = por %p394, %p395
      %p397 = scmp.ne.s32.totalorder %s383, %s384
      %p398 = scmp.eq.s32.totalorder %s32, 1
      %p399 = por %p397, %p398
      %p401 = scmp.ne.s32.totalorder %s384, %s400
      %p402 = scmp.eq.s32.totalorder %s32, 0
      %p403 = por %p401, %p402
      %s404 = ssub.s32 %s26, %s33
      %p405 = scmp.eq.s32.totalorder %s404, 0
      %s407 = sadd.s32 %s406, 1
      %s408 = scalar_select %p405, %s406, %s407
      %p411 = pneg %p405
      %p412 = scmp.eq.s32.totalorder %s26, 1
      %p413 = por %p411, %p412
      %p414 = scmp.ne.s32.totalorder %s406, %s409
      %p415 = scmp.eq.s32.totalorder %s26, 0
      %p416 = por %p414, %p415
      %p417 = scmp.ne.s32.totalorder %s406, %s409
      %p418 = scmp.eq.s32.totalorder %s31, 1
      %p419 = por %p417, %p418
      %p420 = scmp.ne.s32.totalorder %s409, %s410
      %p421 = scmp.eq.s32.totalorder %s31, 0
      %p422 = por %p420, %p421
      %p423 = scmp.ne.s32.totalorder %s409, %s410
      %p424 = scmp.eq.s32.totalorder %s32, 1
      %p425 = por %p423, %p424
      %p427 = scmp.ne.s32.totalorder %s410, %s426
      %p428 = scmp.eq.s32.totalorder %s32, 0
      %p429 = por %p427, %p428
      %s431 = sadd.s32 %s430, 1
      %p434 = scmp.eq.s32.totalorder %s26, 1
      %p435 = scmp.ne.s32.totalorder %s430, %s432
      %p436 = scmp.eq.s32.totalorder %s26, 0
      %p437 = por %p435, %p436
      %p438 = scmp.ne.s32.totalorder %s430, %s432
      %p439 = scmp.eq.s32.totalorder %s31, 1
      %p440 = por %p438, %p439
      %p441 = scmp.ne.s32.totalorder %s432, %s433
      %p442 = scmp.eq.s32.totalorder %s31, 0
      %p443 = por %p441, %p442
      %p444 = scmp.ne.s32.totalorder %s432, %s433
      %p445 = scmp.eq.s32.totalorder %s32, 1
      %p446 = por %p444, %p445
      %p448 = scmp.ne.s32.totalorder %s433, %s447
      %p449 = scmp.eq.s32.totalorder %s32, 0
      %p450 = por %p448, %p449
      %p451 = scmp.le.s32.totalorder 1, %s26
      %p452 = scmp.lt.s32.totalorder %s26, 3
      %p453 = pnand %p451, %p452
      %p454 = pneg %p453
      // Predicated region
      $region9: #{tpu_custom_call.1} parent=5 // pred_check
        _
      $region10: #{tpu_custom_call.1} parent=5 // pred_check_branch
        %456 = sbr.rel (%p453) target = $region12
      $region11: #{tpu_custom_call.1} parent=5 // pred_region
        %s457 = ssub.s32 %s26, 1
        // Predicated region
        $region13: #{tpu_custom_call.1} parent=11 // pred_check
          %p458 = pneg %p47
        $region14: #{tpu_custom_call.1} parent=11 // pred_check_branch
          %460 = sbr.rel (%p458) target = $region16
        $region15: #{tpu_custom_call.1} parent=11 // pred_region
          %s462 = ssub.s32 256, 256
          %463 = vsyncadd [#allocation4], %s462
          %s464 = sshll.u32 [#allocation3], 4
          %s465 = int_to_ptr.vmem [resolvable:$true] %s464
          %470 = dma.hbm_to_vmem [thread:$0]  %s0, 256, %s465, [#allocation4], 128, 128, 8
        $region16: #{tpu_custom_call.1} parent=11 // pred_fallthru
          _
        // Predicated region
        $region17: #{tpu_custom_call.1} parent=11 // pred_check
          %p471 = pneg %p68
        $region18: #{tpu_custom_call.1} parent=11 // pred_check_branch
          %473 = sbr.rel (%p471) target = $region20
        $region19: #{tpu_custom_call.1} parent=11 // pred_region
          %s475 = ssub.s32 32, 32
          %476 = vsyncadd [#allocation7], %s475
          %s477 = sshll.u32 [#allocation6], 4
          %s478 = int_to_ptr.vmem [resolvable:$true] %s477
          %483 = dma.hbm_to_vmem [thread:$0]  %s1, 32, %s478, [#allocation7], 16, 16, 1
        $region20: #{tpu_custom_call.1} parent=11 // pred_fallthru
          _
        // Predicated region
        $region21: #{tpu_custom_call.1} parent=11 // pred_check
          %p484 = pneg %p89
        $region22: #{tpu_custom_call.1} parent=11 // pred_check_branch
          %486 = sbr.rel (%p484) target = $region24
        $region23: #{tpu_custom_call.1} parent=11 // pred_region
          %s488 = ssub.s32 16, 16
          %489 = vsyncadd [#allocation7], %s488
          %s491 = sshll.u32 [#allocation8], 4
          %s492 = int_to_ptr.vmem [resolvable:$true] %s491
          %494 = dma.hbm_to_vmem [thread:$0]  %s2, 16, %s492, [#allocation7]
        $region24: #{tpu_custom_call.1} parent=11 // pred_fallthru
          _
        // Predicated region
        $region25: #{tpu_custom_call.1} parent=11 // pred_check
          %p495 = pneg %p110
        $region26: #{tpu_custom_call.1} parent=11 // pred_check_branch
          %497 = sbr.rel (%p495) target = $region28
        $region27: #{tpu_custom_call.1} parent=11 // pred_region
          %s499 = ssub.s32 16, 16
          %500 = vsyncadd [#allocation10], %s499
          %s502 = sshll.u32 [#allocation9], 4
          %s503 = int_to_ptr.vmem [resolvable:$true] %s502
          %505 = dma.hbm_to_vmem [thread:$0]  %s3, 16, %s503, [#allocation10]
        $region28: #{tpu_custom_call.1} parent=11 // pred_fallthru
          _
      $region12: #{tpu_custom_call.1} parent=5 // pred_fallthru
        _
      %p506 = scmp.lt.s32.totalorder %s26, 2
      // Predicated region
      $region29: #{tpu_custom_call.1} parent=5 // pred_check
        %p507 = pneg %p506
      $region30: #{tpu_custom_call.1} parent=5 // pred_check_branch
        %509 = sbr.rel (%p507) target = $region32
      $region31: #{tpu_custom_call.1} parent=5 // pred_region
        // Predicated region
        $region33: #{tpu_custom_call.1} parent=31 // pred_check
          %p510 = pneg %p130
        $region34: #{tpu_custom_call.1} parent=31 // pred_check_branch
          %512 = sbr.rel (%p510) target = $region36
        $region35: #{tpu_custom_call.1} parent=31 // pred_region
          %s513 = sand.u32 %s26, 1
          %s514 = scalar_lea.sflag [#allocation4], %s513
          %s515 = sand.u32 %s120, 1
          %s516 = smul.addr %s515, 16
          %s517 = scalar_lea.vmem [#allocation11], %s516
          %s519 = ssub.s32 256, 256
          %520 = vsyncadd %s514, %s519
          %s521 = smul.addr %s26, 4
          %s522 = smul.addr %s521, 64
          %s523 = scalar_lea.hbm %s4, %s522
          %s524 = sshll.u32 %s517, 4
          %s525 = int_to_ptr.vmem [resolvable:$true] %s524
          %530 = dma.hbm_to_vmem [thread:$0]  %s523, 256, %s525, %s514, 64, 64, 4
        $region36: #{tpu_custom_call.1} parent=31 // pred_fallthru
          _
        // Predicated region
        $region37: #{tpu_custom_call.1} parent=31 // pred_check
          %p531 = pneg %p156
        $region38: #{tpu_custom_call.1} parent=31 // pred_check_branch
          %533 = sbr.rel (%p531) target = $region40
        $region39: #{tpu_custom_call.1} parent=31 // pred_region
          %s534 = sand.u32 %s26, 1
          %s535 = scalar_lea.sflag [#allocation4], %s534
          %s536 = sand.u32 %s146, 1
          %s537 = scalar_lea.vmem [#allocation12], %s536
          %s539 = ssub.s32 16, 16
          %540 = vsyncadd %s535, %s539
          %s541 = smul.addr %s26, 16
          %s542 = scalar_lea.hbm %s5, %s541
          %s544 = sshll.u32 %s537, 4
          %s545 = int_to_ptr.vmem [resolvable:$true] %s544
          %547 = dma.hbm_to_vmem [thread:$0]  %s542, 16, %s545, %s535
        $region40: #{tpu_custom_call.1} parent=31 // pred_fallthru
          _
        // Predicated region
        $region41: #{tpu_custom_call.1} parent=31 // pred_check
          %p548 = pneg %p182
        $region42: #{tpu_custom_call.1} parent=31 // pred_check_branch
          %550 = sbr.rel (%p548) target = $region44
        $region43: #{tpu_custom_call.1} parent=31 // pred_region
          %s551 = sand.u32 %s26, 1
          %s552 = scalar_lea.sflag [#allocation4], %s551
          %s553 = sand.u32 %s172, 1
          %s554 = smul.addr %s553, 16
          %s555 = scalar_lea.vmem [#allocation13], %s554
          %s557 = ssub.s32 256, 256
          %558 = vsyncadd %s552, %s557
          %s559 = smul.addr %s26, 4
          %s560 = smul.addr %s559, 64
          %s561 = scalar_lea.hbm %s6, %s560
          %s562 = sshll.u32 %s555, 4
          %s563 = int_to_ptr.vmem [resolvable:$true] %s562
          %568 = dma.hbm_to_vmem [thread:$0]  %s561, 256, %s563, %s552, 64, 64, 4
        $region44: #{tpu_custom_call.1} parent=31 // pred_fallthru
          _
        // Predicated region
        $region45: #{tpu_custom_call.1} parent=31 // pred_check
          %p569 = pneg %p208
        $region46: #{tpu_custom_call.1} parent=31 // pred_check_branch
          %571 = sbr.rel (%p569) target = $region48
        $region47: #{tpu_custom_call.1} parent=31 // pred_region
          %s572 = sand.u32 %s26, 1
          %s573 = scalar_lea.sflag [#allocation4], %s572
          %s574 = sand.u32 %s198, 1
          %s575 = scalar_lea.vmem [#allocation14], %s574
          %s577 = ssub.s32 16, 16
          %578 = vsyncadd %s573, %s577
          %s579 = smul.addr %s26, 16
          %s580 = scalar_lea.hbm %s7, %s579
          %s582 = sshll.u32 %s575, 4
          %s583 = int_to_ptr.vmem [resolvable:$true] %s582
          %585 = dma.hbm_to_vmem [thread:$0]  %s580, 16, %s583, %s573
        $region48: #{tpu_custom_call.1} parent=31 // pred_fallthru
          _
        // Predicated region
        $region49: #{tpu_custom_call.1} parent=31 // pred_check
          %p586 = pneg %p234
        $region50: #{tpu_custom_call.1} parent=31 // pred_check_branch
          %588 = sbr.rel (%p586) target = $region52
        $region51: #{tpu_custom_call.1} parent=31 // pred_region
          %s589 = sand.u32 %s26, 1
          %s590 = scalar_lea.sflag [#allocation4], %s589
          %s591 = sand.u32 %s224, 1
          %s592 = scalar_lea.vmem [#allocation15], %s591
          %s594 = ssub.s32 16, 16
          %595 = vsyncadd %s590, %s594
          %s596 = smul.addr %s26, 16
          %s597 = scalar_lea.hbm %s8, %s596
          %s599 = sshll.u32 %s592, 4
          %s600 = int_to_ptr.vmem [resolvable:$true] %s599
          %602 = dma.hbm_to_vmem [thread:$0]  %s597, 16, %s600, %s590
        $region52: #{tpu_custom_call.1} parent=31 // pred_fallthru
          _
        // Predicated region
        $region53: #{tpu_custom_call.1} parent=31 // pred_check
          %p603 = pneg %p260
        $region54: #{tpu_custom_call.1} parent=31 // pred_check_branch
          %605 = sbr.rel (%p603) target = $region56
        $region55: #{tpu_custom_call.1} parent=31 // pred_region
          %s606 = sand.u32 %s26, 1
          %s607 = scalar_lea.sflag [#allocation4], %s606
          %s608 = sand.u32 %s250, 1
          %s609 = scalar_lea.vmem [#allocation16], %s608
          %s611 = ssub.s32 16, 16
          %612 = vsyncadd %s607, %s611
          %s613 = smul.addr %s26, 16
          %s614 = scalar_lea.hbm %s9, %s613
          %s616 = sshll.u32 %s609, 4
          %s617 = int_to_ptr.vmem [resolvable:$true] %s616
          %619 = dma.hbm_to_vmem [thread:$0]  %s614, 16, %s617, %s607
        $region56: #{tpu_custom_call.1} parent=31 // pred_fallthru
          _
        // Predicated region
        $region57: #{tpu_custom_call.1} parent=31 // pred_check
          %p620 = pneg %p286
        $region58: #{tpu_custom_call.1} parent=31 // pred_check_branch
          %622 = sbr.rel (%p620) target = $region60
        $region59: #{tpu_custom_call.1} parent=31 // pred_region
          %s623 = sand.u32 %s26, 1
          %s624 = scalar_lea.sflag [#allocation4], %s623
          %s625 = sand.u32 %s276, 1
          %s626 = smul.addr %s625, 16
          %s627 = scalar_lea.vmem [#allocation17], %s626
          %s629 = ssub.s32 256, 256
          %630 = vsyncadd %s624, %s629
          %s631 = smul.addr %s26, 4
          %s632 = smul.addr %s631, 64
          %s633 = scalar_lea.hbm %s10, %s632
          %s634 = sshll.u32 %s627, 4
          %s635 = int_to_ptr.vmem [resolvable:$true] %s634
          %640 = dma.hbm_to_vmem [thread:$0]  %s633, 256, %s635, %s624, 64, 64, 4
        $region60: #{tpu_custom_call.1} parent=31 // pred_fallthru
          _
        // Predicated region
        $region61: #{tpu_custom_call.1} parent=31 // pred_check
          %p641 = pneg %p312
        $region62: #{tpu_custom_call.1} parent=31 // pred_check_branch
          %643 = sbr.rel (%p641) target = $region64
        $region63: #{tpu_custom_call.1} parent=31 // pred_region
          %s644 = sand.u32 %s26, 1
          %s645 = scalar_lea.sflag [#allocation4], %s644
          %s646 = sand.u32 %s302, 1
          %s647 = scalar_lea.vmem [#allocation18], %s646
          %s649 = ssub.s32 16, 16
          %650 = vsyncadd %s645, %s649
          %s651 = smul.addr %s26, 16
          %s652 = scalar_lea.hbm %s11, %s651
          %s654 = sshll.u32 %s647, 4
          %s655 = int_to_ptr.vmem [resolvable:$true] %s654
          %657 = dma.hbm_to_vmem [thread:$0]  %s652, 16, %s655, %s645
        $region64: #{tpu_custom_call.1} parent=31 // pred_fallthru
          _
        // Predicated region
        $region65: #{tpu_custom_call.1} parent=31 // pred_check
          %p658 = pneg %p338
        $region66: #{tpu_custom_call.1} parent=31 // pred_check_branch
          %660 = sbr.rel (%p658) target = $region68
        $region67: #{tpu_custom_call.1} parent=31 // pred_region
          %s661 = sand.u32 %s26, 1
          %s662 = scalar_lea.sflag [#allocation4], %s661
          %s663 = sand.u32 %s328, 1
          %s664 = smul.addr %s663, 32
          %s665 = scalar_lea.vmem [#allocation19], %s664
          %s667 = ssub.s32 512, 512
          %668 = vsyncadd %s662, %s667
          %s669 = smul.addr %s26, 8
          %s670 = smul.addr %s669, 64
          %s671 = scalar_lea.hbm %s12, %s670
          %s672 = sshll.u32 %s665, 4
          %s673 = int_to_ptr.vmem [resolvable:$true] %s672
          %678 = dma.hbm_to_vmem [thread:$0]  %s671, 512, %s673, %s662, 64, 64, 4
        $region68: #{tpu_custom_call.1} parent=31 // pred_fallthru
          _
        // Predicated region
        $region69: #{tpu_custom_call.1} parent=31 // pred_check
          %p679 = pneg %p364
        $region70: #{tpu_custom_call.1} parent=31 // pred_check_branch
          %681 = sbr.rel (%p679) target = $region72
        $region71: #{tpu_custom_call.1} parent=31 // pred_region
          %s682 = sand.u32 %s26, 1
          %s683 = scalar_lea.sflag [#allocation4], %s682
          %s684 = sand.u32 %s354, 1
          %s685 = scalar_lea.vmem [#allocation20], %s684
          %s687 = ssub.s32 16, 16
          %688 = vsyncadd %s683, %s687
          %s689 = smul.addr %s26, 16
          %s690 = scalar_lea.hbm %s13, %s689
          %s692 = sshll.u32 %s685, 4
          %s693 = int_to_ptr.vmem [resolvable:$true] %s692
          %695 = dma.hbm_to_vmem [thread:$0]  %s690, 16, %s693, %s683
        $region72: #{tpu_custom_call.1} parent=31 // pred_fallthru
          _
        // Predicated region
        $region73: #{tpu_custom_call.1} parent=31 // pred_check
          %p696 = pneg %p390
        $region74: #{tpu_custom_call.1} parent=31 // pred_check_branch
          %698 = sbr.rel (%p696) target = $region76
        $region75: #{tpu_custom_call.1} parent=31 // pred_region
          %s699 = sand.u32 %s26, 1
          %s700 = scalar_lea.sflag [#allocation4], %s699
          %s701 = sand.u32 %s380, 1
          %s702 = scalar_lea.vmem [#allocation21], %s701
          %s704 = ssub.s32 16, 16
          %705 = vsyncadd %s700, %s704
          %s706 = smul.addr %s26, 16
          %s707 = scalar_lea.hbm %s14, %s706
          %s709 = sshll.u32 %s702, 4
          %s710 = int_to_ptr.vmem [resolvable:$true] %s709
          %712 = dma.hbm_to_vmem [thread:$0]  %s707, 16, %s710, %s700
        $region76: #{tpu_custom_call.1} parent=31 // pred_fallthru
          _
        // Predicated region
        $region77: #{tpu_custom_call.1} parent=31 // pred_check
          %p713 = pneg %p416
        $region78: #{tpu_custom_call.1} parent=31 // pred_check_branch
          %715 = sbr.rel (%p713) target = $region80
        $region79: #{tpu_custom_call.1} parent=31 // pred_region
          %s716 = sand.u32 %s26, 1
          %s717 = scalar_lea.sflag [#allocation4], %s716
          %s718 = sand.u32 %s406, 1
          %s719 = scalar_lea.vmem [#allocation22], %s718
          %s721 = ssub.s32 16, 16
          %722 = vsyncadd %s717, %s721
          %s723 = smul.addr %s26, 16
          %s724 = scalar_lea.hbm %s15, %s723
          %s726 = sshll.u32 %s719, 4
          %s727 = int_to_ptr.vmem [resolvable:$true] %s726
          %729 = dma.hbm_to_vmem [thread:$0]  %s724, 16, %s727, %s717
        $region80: #{tpu_custom_call.1} parent=31 // pred_fallthru
          _
      $region32: #{tpu_custom_call.1} parent=5 // pred_fallthru
        _
      %p730 = scmp.le.s32.totalorder 1, %s26
      %p731 = scmp.lt.s32.totalorder %s26, 3
      %p732 = pnand %p730, %p731
      %p733 = pneg %p732
      // Predicated region
      $region81: #{tpu_custom_call.1} parent=5 // pred_check
        _
      $region82: #{tpu_custom_call.1} parent=5 // pred_check_branch
        %735 = sbr.rel (%p732) target = $region84
      $region83: #{tpu_custom_call.1} parent=5 // pred_region
        %s736 = ssub.s32 %s26, 1
        // Predicated region
        $region85: #{tpu_custom_call.1} parent=83 // pred_check
          %p737 = pneg %p47
        $region86: #{tpu_custom_call.1} parent=83 // pred_check_branch
          %739 = sbr.rel (%p737) target = $region88
        $region87: #{tpu_custom_call.1} parent=83 // pred_region
          %740 = dma.done [#allocation4], 256
        $region88: #{tpu_custom_call.1} parent=83 // pred_fallthru
          _
        // Predicated region
        $region89: #{tpu_custom_call.1} parent=83 // pred_check
          %p741 = pneg %p68
        $region90: #{tpu_custom_call.1} parent=83 // pred_check_branch
          %743 = sbr.rel (%p741) target = $region92
        $region91: #{tpu_custom_call.1} parent=83 // pred_region
          %744 = dma.done [#allocation7], 32
        $region92: #{tpu_custom_call.1} parent=83 // pred_fallthru
          _
        // Predicated region
        $region93: #{tpu_custom_call.1} parent=83 // pred_check
          %p745 = pneg %p89
        $region94: #{tpu_custom_call.1} parent=83 // pred_check_branch
          %747 = sbr.rel (%p745) target = $region96
        $region95: #{tpu_custom_call.1} parent=83 // pred_region
          %748 = dma.done [#allocation7], 16
        $region96: #{tpu_custom_call.1} parent=83 // pred_fallthru
          _
        // Predicated region
        $region97: #{tpu_custom_call.1} parent=83 // pred_check
          %p749 = pneg %p110
        $region98: #{tpu_custom_call.1} parent=83 // pred_check_branch
          %751 = sbr.rel (%p749) target = $region100
        $region99: #{tpu_custom_call.1} parent=83 // pred_region
          %752 = dma.done [#allocation10], 16
        $region100: #{tpu_custom_call.1} parent=83 // pred_fallthru
          _
        %s753 = sand.u32 %s31, 1
        %s754 = scalar_lea.sflag [#allocation4], %s753
        %s755 = sand.u32 %s123, 1
        %s756 = smul.addr %s755, 16
        %s757 = scalar_lea.vmem [#allocation11], %s756
        // Predicated region
        $region101: #{tpu_custom_call.1} parent=83 // pred_check
          %p758 = pneg %p136
        $region102: #{tpu_custom_call.1} parent=83 // pred_check_branch
          %760 = sbr.rel (%p758) target = $region104
        $region103: #{tpu_custom_call.1} parent=83 // pred_region
          %761 = dma.done %s754, 256
        $region104: #{tpu_custom_call.1} parent=83 // pred_fallthru
          _
        %s762 = sand.u32 %s31, 1
        %s763 = scalar_lea.sflag [#allocation4], %s762
        %s764 = sand.u32 %s149, 1
        %s765 = scalar_lea.vmem [#allocation12], %s764
        // Predicated region
        $region105: #{tpu_custom_call.1} parent=83 // pred_check
          %p766 = pneg %p162
        $region106: #{tpu_custom_call.1} parent=83 // pred_check_branch
          %768 = sbr.rel (%p766) target = $region108
        $region107: #{tpu_custom_call.1} parent=83 // pred_region
          %769 = dma.done %s763, 16
        $region108: #{tpu_custom_call.1} parent=83 // pred_fallthru
          _
        %s770 = sand.u32 %s31, 1
        %s771 = scalar_lea.sflag [#allocation4], %s770
        %s772 = sand.u32 %s175, 1
        %s773 = smul.addr %s772, 16
        %s774 = scalar_lea.vmem [#allocation13], %s773
        // Predicated region
        $region109: #{tpu_custom_call.1} parent=83 // pred_check
          %p775 = pneg %p188
        $region110: #{tpu_custom_call.1} parent=83 // pred_check_branch
          %777 = sbr.rel (%p775) target = $region112
        $region111: #{tpu_custom_call.1} parent=83 // pred_region
          %778 = dma.done %s771, 256
        $region112: #{tpu_custom_call.1} parent=83 // pred_fallthru
          _
        %s779 = sand.u32 %s31, 1
        %s780 = scalar_lea.sflag [#allocation4], %s779
        %s781 = sand.u32 %s201, 1
        %s782 = scalar_lea.vmem [#allocation14], %s781
        // Predicated region
        $region113: #{tpu_custom_call.1} parent=83 // pred_check
          %p783 = pneg %p214
        $region114: #{tpu_custom_call.1} parent=83 // pred_check_branch
          %785 = sbr.rel (%p783) target = $region116
        $region115: #{tpu_custom_call.1} parent=83 // pred_region
          %786 = dma.done %s780, 16
        $region116: #{tpu_custom_call.1} parent=83 // pred_fallthru
          _
        %s787 = sand.u32 %s31, 1
        %s788 = scalar_lea.sflag [#allocation4], %s787
        %s789 = sand.u32 %s227, 1
        %s790 = scalar_lea.vmem [#allocation15], %s789
        // Predicated region
        $region117: #{tpu_custom_call.1} parent=83 // pred_check
          %p791 = pneg %p240
        $region118: #{tpu_custom_call.1} parent=83 // pred_check_branch
          %793 = sbr.rel (%p791) target = $region120
        $region119: #{tpu_custom_call.1} parent=83 // pred_region
          %794 = dma.done %s788, 16
        $region120: #{tpu_custom_call.1} parent=83 // pred_fallthru
          _
        %s795 = sand.u32 %s31, 1
        %s796 = scalar_lea.sflag [#allocation4], %s795
        %s797 = sand.u32 %s253, 1
        %s798 = scalar_lea.vmem [#allocation16], %s797
        // Predicated region
        $region121: #{tpu_custom_call.1} parent=83 // pred_check
          %p799 = pneg %p266
        $region122: #{tpu_custom_call.1} parent=83 // pred_check_branch
          %801 = sbr.rel (%p799) target = $region124
        $region123: #{tpu_custom_call.1} parent=83 // pred_region
          %802 = dma.done %s796, 16
        $region124: #{tpu_custom_call.1} parent=83 // pred_fallthru
          _
        %s803 = sand.u32 %s31, 1
        %s804 = scalar_lea.sflag [#allocation4], %s803
        %s805 = sand.u32 %s279, 1
        %s806 = smul.addr %s805, 16
        %s807 = scalar_lea.vmem [#allocation17], %s806
        // Predicated region
        $region125: #{tpu_custom_call.1} parent=83 // pred_check
          %p808 = pneg %p292
        $region126: #{tpu_custom_call.1} parent=83 // pred_check_branch
          %810 = sbr.rel (%p808) target = $region128
        $region127: #{tpu_custom_call.1} parent=83 // pred_region
          %811 = dma.done %s804, 256
        $region128: #{tpu_custom_call.1} parent=83 // pred_fallthru
          _
        %s812 = sand.u32 %s31, 1
        %s813 = scalar_lea.sflag [#allocation4], %s812
        %s814 = sand.u32 %s305, 1
        %s815 = scalar_lea.vmem [#allocation18], %s814
        // Predicated region
        $region129: #{tpu_custom_call.1} parent=83 // pred_check
          %p816 = pneg %p318
        $region130: #{tpu_custom_call.1} parent=83 // pred_check_branch
          %818 = sbr.rel (%p816) target = $region132
        $region131: #{tpu_custom_call.1} parent=83 // pred_region
          %819 = dma.done %s813, 16
        $region132: #{tpu_custom_call.1} parent=83 // pred_fallthru
          _
        %s820 = sand.u32 %s31, 1
        %s821 = scalar_lea.sflag [#allocation4], %s820
        %s822 = sand.u32 %s331, 1
        %s823 = smul.addr %s822, 32
        %s824 = scalar_lea.vmem [#allocation19], %s823
        // Predicated region
        $region133: #{tpu_custom_call.1} parent=83 // pred_check
          %p825 = pneg %p344
        $region134: #{tpu_custom_call.1} parent=83 // pred_check_branch
          %827 = sbr.rel (%p825) target = $region136
        $region135: #{tpu_custom_call.1} parent=83 // pred_region
          %828 = dma.done %s821, 512
        $region136: #{tpu_custom_call.1} parent=83 // pred_fallthru
          _
        %s829 = sand.u32 %s31, 1
        %s830 = scalar_lea.sflag [#allocation4], %s829
        %s831 = sand.u32 %s357, 1
        %s832 = scalar_lea.vmem [#allocation20], %s831
        // Predicated region
        $region137: #{tpu_custom_call.1} parent=83 // pred_check
          %p833 = pneg %p370
        $region138: #{tpu_custom_call.1} parent=83 // pred_check_branch
          %835 = sbr.rel (%p833) target = $region140
        $region139: #{tpu_custom_call.1} parent=83 // pred_region
          %836 = dma.done %s830, 16
        $region140: #{tpu_custom_call.1} parent=83 // pred_fallthru
          _
        %s837 = sand.u32 %s31, 1
        %s838 = scalar_lea.sflag [#allocation4], %s837
        %s839 = sand.u32 %s383, 1
        %s840 = scalar_lea.vmem [#allocation21], %s839
        // Predicated region
        $region141: #{tpu_custom_call.1} parent=83 // pred_check
          %p841 = pneg %p396
        $region142: #{tpu_custom_call.1} parent=83 // pred_check_branch
          %843 = sbr.rel (%p841) target = $region144
        $region143: #{tpu_custom_call.1} parent=83 // pred_region
          %844 = dma.done %s838, 16
        $region144: #{tpu_custom_call.1} parent=83 // pred_fallthru
          _
        %s845 = sand.u32 %s31, 1
        %s846 = scalar_lea.sflag [#allocation4], %s845
        %s847 = sand.u32 %s409, 1
        %s848 = scalar_lea.vmem [#allocation22], %s847
        // Predicated region
        $region145: #{tpu_custom_call.1} parent=83 // pred_check
          %p849 = pneg %p422
        $region146: #{tpu_custom_call.1} parent=83 // pred_check_branch
          %851 = sbr.rel (%p849) target = $region148
        $region147: #{tpu_custom_call.1} parent=83 // pred_region
          %852 = dma.done %s846, 16
        $region148: #{tpu_custom_call.1} parent=83 // pred_fallthru
          _
        %p853 = pneg %p47
        %p854 = pneg %p44
        %p855 = pneg %p68
        %p856 = pneg %p65
        %p857 = pneg %p89
        %p858 = pneg %p86
        %p859 = pneg %p110
        %p860 = pneg %p107
        %s861 = sand.u32 %s31, 1
        %s862 = scalar_lea.sflag [#allocation4], %s861
        %s863 = sand.u32 %s123, 1
        %s864 = smul.addr %s863, 16
        %s865 = scalar_lea.vmem [#allocation11], %s864
        %p866 = pneg %p136
        %p867 = pneg %p133
        %s868 = sand.u32 %s31, 1
        %s869 = scalar_lea.sflag [#allocation4], %s868
        %s870 = sand.u32 %s149, 1
        %s871 = scalar_lea.vmem [#allocation12], %s870
        %p872 = pneg %p162
        %p873 = pneg %p159
        %s874 = sand.u32 %s31, 1
        %s875 = scalar_lea.sflag [#allocation4], %s874
        %s876 = sand.u32 %s175, 1
        %s877 = smul.addr %s876, 16
        %s878 = scalar_lea.vmem [#allocation13], %s877
        %p879 = pneg %p188
        %p880 = pneg %p185
        %s881 = sand.u32 %s31, 1
        %s882 = scalar_lea.sflag [#allocation4], %s881
        %s883 = sand.u32 %s201, 1
        %s884 = scalar_lea.vmem [#allocation14], %s883
        %p885 = pneg %p214
        %p886 = pneg %p211
        %s887 = sand.u32 %s31, 1
        %s888 = scalar_lea.sflag [#allocation4], %s887
        %s889 = sand.u32 %s227, 1
        %s890 = scalar_lea.vmem [#allocation15], %s889
        %p891 = pneg %p240
        %p892 = pneg %p237
        %s893 = sand.u32 %s31, 1
        %s894 = scalar_lea.sflag [#allocation4], %s893
        %s895 = sand.u32 %s253, 1
        %s896 = scalar_lea.vmem [#allocation16], %s895
        %p897 = pneg %p266
        %p898 = pneg %p263
        %s899 = sand.u32 %s31, 1
        %s900 = scalar_lea.sflag [#allocation4], %s899
        %s901 = sand.u32 %s279, 1
        %s902 = smul.addr %s901, 16
        %s903 = scalar_lea.vmem [#allocation17], %s902
        %p904 = pneg %p292
        %p905 = pneg %p289
        %s906 = sand.u32 %s31, 1
        %s907 = scalar_lea.sflag [#allocation4], %s906
        %s908 = sand.u32 %s305, 1
        %s909 = scalar_lea.vmem [#allocation18], %s908
        %p910 = pneg %p318
        %p911 = pneg %p315
        %s912 = sand.u32 %s31, 1
        %s913 = scalar_lea.sflag [#allocation4], %s912
        %s914 = sand.u32 %s331, 1
        %s915 = smul.addr %s914, 32
        %s916 = scalar_lea.vmem [#allocation19], %s915
        %p917 = pneg %p344
        %p918 = pneg %p341
        %s919 = sand.u32 %s31, 1
        %s920 = scalar_lea.sflag [#allocation4], %s919
        %s921 = sand.u32 %s357, 1
        %s922 = scalar_lea.vmem [#allocation20], %s921
        %p923 = pneg %p370
        %p924 = pneg %p367
        %s925 = sand.u32 %s31, 1
        %s926 = scalar_lea.sflag [#allocation4], %s925
        %s927 = sand.u32 %s383, 1
        %s928 = scalar_lea.vmem [#allocation21], %s927
        %p929 = pneg %p396
        %p930 = pneg %p393
        %s931 = sand.u32 %s31, 1
        %s932 = scalar_lea.sflag [#allocation4], %s931
        %s933 = sand.u32 %s409, 1
        %s934 = scalar_lea.vmem [#allocation22], %s933
        %p935 = pneg %p422
        %p936 = pneg %p419
        %p937 = pneg %p443
        %p938 = pneg %p440
        %p940 = scmp.eq.s32.totalorder %s31, 0
        // Predicated region
        $region149: #{tpu_custom_call.1} parent=83 // pred_check
          %p941 = pneg %p940
        $region150: #{tpu_custom_call.1} parent=83 // pred_check_branch
          %943 = sbr.rel (%p941) target = $region152
        $region151: #{tpu_custom_call.1} parent=83 // pred_region
          %v944 = vld [vmem:[#allocation3] sm:$0xff]
          %v945 = vld [vmem:[#allocation3 + $0x8] sm:$0xff]
          %v946 = vld [vmem:[#allocation8] sm:$0x1]
          %v947 = vld [vmem:[#allocation9] sm:$0x1]
          %vm948 = vcmask 261120
          %v949 = vsel %vm948, %v944, 0.0
          %950 = vadd.xlane.f32.xlu0 %v949
          %v951 = vpop.xlane.xlu0 %950
          %v952 = vsel %vm948, %v945, 0.0
          %953 = vadd.xlane.f32.xlu0 %v952
          %v954 = vpop.xlane.xlu0 %953
          %v955 = vrcp.pop 32.0
          %v956 = vmul.f32 %v951, %v955
          %v957 = vmul.f32 %v954, %v955
          %v958 = vsub.f32 %v944, %v956
          %v959 = vsub.f32 %v945, %v957
          %v960 = vmul.f32 %v958, %v958
          %v961 = vmul.f32 %v959, %v959
          %v962 = vsel %vm948, %v960, 0.0
          %963 = vadd.xlane.f32.xlu0 %v962
          %v964 = vpop.xlane.xlu0 %963
          %v965 = vsel %vm948, %v961, 0.0
          %966 = vadd.xlane.f32.xlu0 %v965
          %v967 = vpop.xlane.xlu0 %966
          %v968 = vmul.f32 %v964, %v955
          %v969 = vmul.f32 %v967, %v955
          %v970 = vadd.f32 %v968, 1e-12
          %v971 = vadd.f32 %v969, 1e-12
          %v972 = vrsqrt.pop %v970
          %v973 = vrsqrt.pop %v971
          %v974 = vmul.f32 %v958, %v972
          %v975 = vmul.f32 %v959, %v973
          %v977 = vlaneseq
          %v978 = vshrl.u32 %v977, 7
          %v979 = vsub.s32 0, %v978
          %v980 = vrot.slane %v946, %v979
          %v982 = vmul.f32 %v974, %v980
          %v983 = vmul.f32 %v975, %v980
          %v985 = vlaneseq
          %v986 = vshrl.u32 %v985, 7
          %v987 = vsub.s32 0, %v986
          %v988 = vrot.slane %v947, %v987
          %v990 = vadd.f32 %v982, %v988
          %v991 = vadd.f32 %v983, %v988
          %992 = vst.msk [vmem:[#allocation23] sm:$0xff] %vm948, %v990
          %993 = vst.msk [vmem:[#allocation23 + $0x8] sm:$0xff] %vm948, %v991
        $region152: #{tpu_custom_call.1} parent=83 // pred_fallthru
          _
        %v994 = vld [vmem:[#allocation23] sm:$0xff]
        %v995 = vld [vmem:[#allocation23 + $0x8] sm:$0xff]
        %v996 = vld [vmem:[#allocation6] sm:$0x1]
        %v997 = vld [vmem:[#allocation6 + $0x1] sm:$0x1]
        %v998 = vpack.c.bf16 %v995, %v994
        %v999 = vld [vmem:[%s757] sm:$0xf]
        %v1000 = vld [vmem:[%s757 + $0x4] sm:$0xf]
        %v1001 = vld [vmem:[%s757 + $0x8] sm:$0xf]
        %v1002 = vld [vmem:[%s757 + $0xc] sm:$0xf]
        %v1003 = vld [vmem:[%s765] sm:$0x1]
        %v1005 = vlaneseq
        %v1006 = vshrl.u32 %v1005, 7
        %v1007 = vsub.s32 0, %v1006
        %v1008 = vrot.slane %v1003, %v1007
        %v1014 = vunpack.c.l.b16 %v999
        %v1015 = vunpack.c.l.b16 %v1000
        %v1016 = vunpack.c.l.b16 %v1001
        %v1017 = vunpack.c.l.b16 %v1002
        %v1018 = vpack.c.b16 %v1015, %v1014
        %v1019 = vpack.c.b16 %v1017, %v1016
        %vm1022 = vcmask 261120
        %v1024 = vsel %vm1022, %v998, 0
        %1026 = vmatprep.subr.bf16.mxu0 0
        %1027 = vmatpush1.bf16.msra.mxu0 %v1018
        %1028 = vmatprep.subr.bf16.mxu0 0
        %1029 = vmatpush1.bf16.msra.mxu0 %v1019
        %1030 = vmatprep.subr.bf16.mxu0 0
        %1031 = vmatpush1.bf16.msra.mxu0 0
        %1032 = vmatprep.subr.bf16.mxu0 0
        %1033 = vmatpush1.bf16.msra.mxu0 0
        %1034 = vmatprep.subr.bf16.mxu0 0
        %1035 = vmatpush1.bf16.msra.mxu0 0
        %1036 = vmatprep.subr.bf16.mxu0 0
        %1037 = vmatpush1.bf16.msra.mxu0 0
        %1038 = vmatprep.subr.bf16.mxu0 0
        %1039 = vmatpush1.bf16.msra.mxu0 0
        %1040 = vmatprep.subr.bf16.mxu0 0
        %1041 = vmatpush1.bf16.msra.mxu0 0
        %1042 = vmatprep.subr.bf16.mxu0 0
        %1043 = vmatpush1.bf16.msra.mxu0 0
        %1044 = vmatprep.subr.bf16.mxu0 0
        %1045 = vmatpush1.bf16.msra.mxu0 0
        %1046 = vmatprep.subr.bf16.mxu0 0
        %1047 = vmatpush1.bf16.msra.mxu0 0
        %1048 = vmatprep.subr.bf16.mxu0 0
        %1049 = vmatpush1.bf16.msra.mxu0 0
        %1050 = vmatprep.subr.bf16.mxu0 0
        %1051 = vmatpush1.bf16.msra.mxu0 0
        %1052 = vmatprep.subr.bf16.mxu0 0
        %1053 = vmatpush1.bf16.msra.mxu0 0
        %1054 = vmatprep.subr.bf16.mxu0 0
        %1055 = vmatpush1.bf16.msra.mxu0 0
        %1056 = vmatprep.subr.bf16.mxu0 0
        %1057 = vmatpush1.bf16.msra.mxu0 0
        %1058 = vmatprep.mubr.bf16.mxu0 0
        %1059 = vmatmul.mubr.bf16.gmra.mrb[0].mxu0 %v1024
        %v1060 = vpop.f32.mrb[0].mxu0
        %v1061 = vadd.f32 %v1008, %v1060
        %v1062 = vpop.f32.mrb[0].mxu0
        %v1063 = vpop.f32.mrb[0].mxu0
        %v1064 = vadd.f32 %v1008, %v1063
        %v1065 = vpop.f32.mrb[0].mxu0
        %1066 = vdwg.mxu0
        %v1067 = vpack.c.bf16 %v1061, %v1061
        %v1068 = vpack.c.bf16 %v1064, %v1064
        %1070 = vrot.lane.b32.xlu0 %v1067, 96
        %v1071 = vpop.permute.xlu0 %1070
        %vm1072 = vcmask 130048
        %v1074 = vsel %vm1072, %v1067, 0
        %v1077 = vsel %vm1072, %v1071, 0
        %1079 = vmatprep.subr.bf16.mxu0 0
        %1080 = vmatpush1.bf16.xpose.msra.mxu0 %v1077
        %1081 = vmatprep.subr.bf16.mxu0 0
        %1082 = vmatpush1.bf16.xpose.msra.mxu0 0
        %1083 = vmatprep.subr.bf16.mxu0 0
        %1084 = vmatpush1.bf16.xpose.msra.mxu0 0
        %1085 = vmatprep.subr.bf16.mxu0 0
        %1086 = vmatpush1.bf16.xpose.msra.mxu0 0
        %1087 = vmatprep.subr.bf16.mxu0 0
        %1088 = vmatpush1.bf16.xpose.msra.mxu0 0
        %1089 = vmatprep.subr.bf16.mxu0 0
        %1090 = vmatpush1.bf16.xpose.msra.mxu0 0
        %1091 = vmatprep.subr.bf16.mxu0 0
        %1092 = vmatpush1.bf16.xpose.msra.mxu0 0
        %1093 = vmatprep.subr.bf16.mxu0 0
        %1094 = vmatpush1.bf16.xpose.msra.mxu0 0
        %1095 = vmatprep.subr.bf16.mxu0 0
        %1096 = vmatpush1.bf16.xpose.msra.mxu0 0
        %1097 = vmatprep.subr.bf16.mxu0 0
        %1098 = vmatpush1.bf16.xpose.msra.mxu0 0
        %1099 = vmatprep.subr.bf16.mxu0 0
        %1100 = vmatpush1.bf16.xpose.msra.mxu0 0
        %1101 = vmatprep.subr.bf16.mxu0 0
        %1102 = vmatpush1.bf16.xpose.msra.mxu0 0
        %1103 = vmatprep.subr.bf16.mxu0 0
        %1104 = vmatpush1.bf16.xpose.msra.mxu0 0
        %1105 = vmatprep.subr.bf16.mxu0 0
        %1106 = vmatpush1.bf16.xpose.msra.mxu0 0
        %1107 = vmatprep.subr.bf16.mxu0 0
        %1108 = vmatpush1.bf16.xpose.msra.mxu0 0
        %1109 = vmatprep.subr.bf16.mxu0 0
        %1110 = vmatpush1.bf16.xpose.msra.mxu0 0
        %1111 = vmatprep.mubr.bf16.mxu0 0
        %1112 = vmatmul.mubr.bf16.gmra.mrb[0].mxu0 %v1074
        %v1113 = vpop.f32.mrb[0].mxu0
        %v1114 = vadd.f32 0.0, %v1113
        %v1115 = vpop.f32.mrb[0].mxu0
        %v1116 = vpop.f32.mrb[0].mxu0
        %v1117 = vpop.f32.mrb[0].mxu0
        %1118 = vdwg.mxu0
        %1120 = vrot.lane.b32.xlu0 %v1068, 96
        %v1121 = vpop.permute.xlu0 %1120
        %v1123 = vsel %vm1072, %v1068, 0
        %v1126 = vsel %vm1072, %v1121, 0
        %1128 = vmatprep.subr.bf16.mxu0 0
        %1129 = vmatpush1.bf16.xpose.msra.mxu0 %v1126
        %1130 = vmatprep.subr.bf16.mxu0 0
        %1131 = vmatpush1.bf16.xpose.msra.mxu0 0
        %1132 = vmatprep.subr.bf16.mxu0 0
        %1133 = vmatpush1.bf16.xpose.msra.mxu0 0
        %1134 = vmatprep.subr.bf16.mxu0 0
        %1135 = vmatpush1.bf16.xpose.msra.mxu0 0
        %1136 = vmatprep.subr.bf16.mxu0 0
        %1137 = vmatpush1.bf16.xpose.msra.mxu0 0
        %1138 = vmatprep.subr.bf16.mxu0 0
        %1139 = vmatpush1.bf16.xpose.msra.mxu0 0
        %1140 = vmatprep.subr.bf16.mxu0 0
        %1141 = vmatpush1.bf16.xpose.msra.mxu0 0
        %1142 = vmatprep.subr.bf16.mxu0 0
        %1143 = vmatpush1.bf16.xpose.msra.mxu0 0
        %1144 = vmatprep.subr.bf16.mxu0 0
        %1145 = vmatpush1.bf16.xpose.msra.mxu0 0
        %1146 = vmatprep.subr.bf16.mxu0 0
        %1147 = vmatpush1.bf16.xpose.msra.mxu0 0
        %1148 = vmatprep.subr.bf16.mxu0 0
        %1149 = vmatpush1.bf16.xpose.msra.mxu0 0
        %1150 = vmatprep.subr.bf16.mxu0 0
        %1151 = vmatpush1.bf16.xpose.msra.mxu0 0
        %1152 = vmatprep.subr.bf16.mxu0 0
        %1153 = vmatpush1.bf16.xpose.msra.mxu0 0
        %1154 = vmatprep.subr.bf16.mxu0 0
        %1155 = vmatpush1.bf16.xpose.msra.mxu0 0
        %1156 = vmatprep.subr.bf16.mxu0 0
        %1157 = vmatpush1.bf16.xpose.msra.mxu0 0
        %1158 = vmatprep.subr.bf16.mxu0 0
        %1159 = vmatpush1.bf16.xpose.msra.mxu0 0
        %1160 = vmatprep.mubr.bf16.mxu0 0
        %1161 = vmatmul.mubr.bf16.gmra.mrb[0].mxu0 %v1123
        %v1162 = vpop.f32.mrb[0].mxu0
        %v1163 = vadd.f32 0.0, %v1162
        %v1164 = vpop.f32.mrb[0].mxu0
        %v1165 = vpop.f32.mrb[0].mxu0
        %v1166 = vpop.f32.mrb[0].mxu0
        %1167 = vdwg.mxu0
        %v1168 = vmul.f32 %v1114, 0.25
        %v1169 = vmul.f32 %v1163, 0.25
        %v1172 = vlaneseq
        %v1173 = vshrl.u32 %v1172, 7
        %v1174 = vsub.s32 0, %v1173
        %v1175 = vrot.slane %v996, %v1174
        %v1176 = vlaneseq
        %v1177 = vshrl.u32 %v1176, 7
        %v1178 = vsub.s32 0, %v1177
        %v1179 = vrot.slane %v997, %v1178
        %v1182 = vadd.f32 %v1168, %v1175
        %v1183 = vadd.f32 %v1169, %v1179
        %vm1184 = vcmask 64512
        %v1185 = vsel %vm1184, %v1182, -inf
        %1186 = vmax.xlane.f32.xlu0 %v1185
        %v1187 = vpop.xlane.xlu0 %1186
        %v1188 = vsel %vm1184, %v1183, -inf
        %1189 = vmax.xlane.f32.xlu0 %v1188
        %v1190 = vpop.xlane.xlu0 %1189
        %v1191 = vsub.f32 %v1182, %v1187
        %v1192 = vsub.f32 %v1183, %v1190
        %v1193 = vmul.f32 %v1191, 1.442695
        %v1194 = vpow.pop %v1193
        %v1195 = vmul.f32 %v1192, 1.442695
        %v1196 = vpow.pop %v1195
        %v1197 = vsel %vm1184, %v1194, 0.0
        %1198 = vadd.xlane.f32.xlu0 %v1197
        %v1199 = vpop.xlane.xlu0 %1198
        %v1200 = vsel %vm1184, %v1196, 0.0
        %1201 = vadd.xlane.f32.xlu0 %v1200
        %v1202 = vpop.xlane.xlu0 %1201
        %v1203 = vrcp.pop %v1199
        %v1204 = vrcp.pop %v1202
        %v1205 = vmul.f32 %v1194, %v1203
        %v1206 = vmul.f32 %v1196, %v1204
        %v1207 = vpack.c.bf16 %v1205, %v1205
        %v1208 = vpack.c.bf16 %v1206, %v1206
        %1209 = vrot.lane.b32.xlu0 %v1067, 64
        %v1210 = vpop.permute.xlu0 %1209
        %v1212 = vsel %vm1184, %v1207, 0
        %vm1214 = vcmask 1043456
        %v1216 = vsel %vm1214, %v1210, 0
        %1218 = vmatprep.subr.bf16.mxu0 0
        %1219 = vmatpush1.bf16.msra.mxu0 %v1216
        %1220 = vmatprep.subr.bf16.mxu0 0
        %1221 = vmatpush1.bf16.msra.mxu0 0
        %1222 = vmatprep.subr.bf16.mxu0 0
        %1223 = vmatpush1.bf16.msra.mxu0 0
        %1224 = vmatprep.subr.bf16.mxu0 0
        %1225 = vmatpush1.bf16.msra.mxu0 0
        %1226 = vmatprep.subr.bf16.mxu0 0
        %1227 = vmatpush1.bf16.msra.mxu0 0
        %1228 = vmatprep.subr.bf16.mxu0 0
        %1229 = vmatpush1.bf16.msra.mxu0 0
        %1230 = vmatprep.subr.bf16.mxu0 0
        %1231 = vmatpush1.bf16.msra.mxu0 0
        %1232 = vmatprep.subr.bf16.mxu0 0
        %1233 = vmatpush1.bf16.msra.mxu0 0
        %1234 = vmatprep.subr.bf16.mxu0 0
        %1235 = vmatpush1.bf16.msra.mxu0 0
        %1236 = vmatprep.subr.bf16.mxu0 0
        %1237 = vmatpush1.bf16.msra.mxu0 0
        %1238 = vmatprep.subr.bf16.mxu0 0
        %1239 = vmatpush1.bf16.msra.mxu0 0
        %1240 = vmatprep.subr.bf16.mxu0 0
        %1241 = vmatpush1.bf16.msra.mxu0 0
        %1242 = vmatprep.subr.bf16.mxu0 0
        %1243 = vmatpush1.bf16.msra.mxu0 0
        %1244 = vmatprep.subr.bf16.mxu0 0
        %1245 = vmatpush1.bf16.msra.mxu0 0
        %1246 = vmatprep.subr.bf16.mxu0 0
        %1247 = vmatpush1.bf16.msra.mxu0 0
        %1248 = vmatprep.subr.bf16.mxu0 0
        %1249 = vmatpush1.bf16.msra.mxu0 0
        %1250 = vmatprep.mubr.bf16.mxu0 0
        %1251 = vmatmul.mubr.bf16.gmra.mrb[0].mxu0 %v1212
        %v1252 = vpop.f32.mrb[0].mxu0
        %v1253 = vadd.f32 0.0, %v1252
        %v1254 = vpop.f32.mrb[0].mxu0
        %v1255 = vpop.f32.mrb[0].mxu0
        %v1256 = vpop.f32.mrb[0].mxu0
        %1257 = vdwg.mxu0
        %1258 = vrot.lane.b32.xlu0 %v1068, 64
        %v1259 = vpop.permute.xlu0 %1258
        %v1261 = vsel %vm1184, %v1208, 0
        %v1264 = vsel %vm1214, %v1259, 0
        %1266 = vmatprep.subr.bf16.mxu0 0
        %1267 = vmatpush1.bf16.msra.mxu0 %v1264
        %1268 = vmatprep.subr.bf16.mxu0 0
        %1269 = vmatpush1.bf16.msra.mxu0 0
        %1270 = vmatprep.subr.bf16.mxu0 0
        %1271 = vmatpush1.bf16.msra.mxu0 0
        %1272 = vmatprep.subr.bf16.mxu0 0
        %1273 = vmatpush1.bf16.msra.mxu0 0
        %1274 = vmatprep.subr.bf16.mxu0 0
        %1275 = vmatpush1.bf16.msra.mxu0 0
        %1276 = vmatprep.subr.bf16.mxu0 0
        %1277 = vmatpush1.bf16.msra.mxu0 0
        %1278 = vmatprep.subr.bf16.mxu0 0
        %1279 = vmatpush1.bf16.msra.mxu0 0
        %1280 = vmatprep.subr.bf16.mxu0 0
        %1281 = vmatpush1.bf16.msra.mxu0 0
        %1282 = vmatprep.subr.bf16.mxu0 0
        %1283 = vmatpush1.bf16.msra.mxu0 0
        %1284 = vmatprep.subr.bf16.mxu0 0
        %1285 = vmatpush1.bf16.msra.mxu0 0
        %1286 = vmatprep.subr.bf16.mxu0 0
        %1287 = vmatpush1.bf16.msra.mxu0 0
        %1288 = vmatprep.subr.bf16.mxu0 0
        %1289 = vmatpush1.bf16.msra.mxu0 0
        %1290 = vmatprep.subr.bf16.mxu0 0
        %1291 = vmatpush1.bf16.msra.mxu0 0
        %1292 = vmatprep.subr.bf16.mxu0 0
        %1293 = vmatpush1.bf16.msra.mxu0 0
        %1294 = vmatprep.subr.bf16.mxu0 0
        %1295 = vmatpush1.bf16.msra.mxu0 0
        %1296 = vmatprep.subr.bf16.mxu0 0
        %1297 = vmatpush1.bf16.msra.mxu0 0
        %1298 = vmatprep.mubr.bf16.mxu0 0
        %1299 = vmatmul.mubr.bf16.gmra.mrb[0].mxu0 %v1261
        %v1300 = vpop.f32.mrb[0].mxu0
        %v1301 = vadd.f32 0.0, %v1300
        %v1302 = vpop.f32.mrb[0].mxu0
        %v1303 = vpop.f32.mrb[0].mxu0
        %v1304 = vpop.f32.mrb[0].mxu0
        %1305 = vdwg.mxu0
        %1306 = vst.msk [vmem:[#allocation2] sm:$0xff] %vm1072, %v1253
        %1307 = vst.msk [vmem:[#allocation2 + $0x8] sm:$0xff] %vm1072, %v1301
        %1308 = vrot.lane.b32.xlu0 %v1067, 112
        %v1309 = vpop.permute.xlu0 %1308
        %1310 = vrot.lane.b32.xlu0 %v1067, 80
        %v1311 = vpop.permute.xlu0 %1310
        %v1313 = vsel %vm1072, %v1309, 0
        %v1316 = vsel %vm1072, %v1311, 0
        %1318 = vmatprep.subr.bf16.mxu0 0
        %1319 = vmatpush1.bf16.xpose.msra.mxu0 %v1316
        %1320 = vmatprep.subr.bf16.mxu0 0
        %1321 = vmatpush1.bf16.xpose.msra.mxu0 0
        %1322 = vmatprep.subr.bf16.mxu0 0
        %1323 = vmatpush1.bf16.xpose.msra.mxu0 0
        %1324 = vmatprep.subr.bf16.mxu0 0
        %1325 = vmatpush1.bf16.xpose.msra.mxu0 0
        %1326 = vmatprep.subr.bf16.mxu0 0
        %1327 = vmatpush1.bf16.xpose.msra.mxu0 0
        %1328 = vmatprep.subr.bf16.mxu0 0
        %1329 = vmatpush1.bf16.xpose.msra.mxu0 0
        %1330 = vmatprep.subr.bf16.mxu0 0
        %1331 = vmatpush1.bf16.xpose.msra.mxu0 0
        %1332 = vmatprep.subr.bf16.mxu0 0
        %1333 = vmatpush1.bf16.xpose.msra.mxu0 0
        %1334 = vmatprep.subr.bf16.mxu0 0
        %1335 = vmatpush1.bf16.xpose.msra.mxu0 0
        %1336 = vmatprep.subr.bf16.mxu0 0
        %1337 = vmatpush1.bf16.xpose.msra.mxu0 0
        %1338 = vmatprep.subr.bf16.mxu0 0
        %1339 = vmatpush1.bf16.xpose.msra.mxu0 0
        %1340 = vmatprep.subr.bf16.mxu0 0
        %1341 = vmatpush1.bf16.xpose.msra.mxu0 0
        %1342 = vmatprep.subr.bf16.mxu0 0
        %1343 = vmatpush1.bf16.xpose.msra.mxu0 0
        %1344 = vmatprep.subr.bf16.mxu0 0
        %1345 = vmatpush1.bf16.xpose.msra.mxu0 0
        %1346 = vmatprep.subr.bf16.mxu0 0
        %1347 = vmatpush1.bf16.xpose.msra.mxu0 0
        %1348 = vmatprep.subr.bf16.mxu0 0
        %1349 = vmatpush1.bf16.xpose.msra.mxu0 0
        %1350 = vmatprep.mubr.bf16.mxu0 0
        %1351 = vmatmul.mubr.bf16.gmra.mrb[0].mxu0 %v1313
        %v1352 = vpop.f32.mrb[0].mxu0
        %v1353 = vadd.f32 0.0, %v1352
        %v1354 = vpop.f32.mrb[0].mxu0
        %v1355 = vpop.f32.mrb[0].mxu0
        %v1356 = vpop.f32.mrb[0].mxu0
        %1357 = vdwg.mxu0
        %1358 = vrot.lane.b32.xlu0 %v1068, 112
        %v1359 = vpop.permute.xlu0 %1358
        %1360 = vrot.lane.b32.xlu0 %v1068, 80
        %v1361 = vpop.permute.xlu0 %1360
        %v1363 = vsel %vm1072, %v1359, 0
        %v1366 = vsel %vm1072, %v1361, 0
        %1368 = vmatprep.subr.bf16.mxu0 0
        %1369 = vmatpush1.bf16.xpose.msra.mxu0 %v1366
        %1370 = vmatprep.subr.bf16.mxu0 0
        %1371 = vmatpush1.bf16.xpose.msra.mxu0 0
        %1372 = vmatprep.subr.bf16.mxu0 0
        %1373 = vmatpush1.bf16.xpose.msra.mxu0 0
        %1374 = vmatprep.subr.bf16.mxu0 0
        %1375 = vmatpush1.bf16.xpose.msra.mxu0 0
        %1376 = vmatprep.subr.bf16.mxu0 0
        %1377 = vmatpush1.bf16.xpose.msra.mxu0 0
        %1378 = vmatprep.subr.bf16.mxu0 0
        %1379 = vmatpush1.bf16.xpose.msra.mxu0 0
        %1380 = vmatprep.subr.bf16.mxu0 0
        %1381 = vmatpush1.bf16.xpose.msra.mxu0 0
        %1382 = vmatprep.subr.bf16.mxu0 0
        %1383 = vmatpush1.bf16.xpose.msra.mxu0 0
        %1384 = vmatprep.subr.bf16.mxu0 0
        %1385 = vmatpush1.bf16.xpose.msra.mxu0 0
        %1386 = vmatprep.subr.bf16.mxu0 0
        %1387 = vmatpush1.bf16.xpose.msra.mxu0 0
        %1388 = vmatprep.subr.bf16.mxu0 0
        %1389 = vmatpush1.bf16.xpose.msra.mxu0 0
        %1390 = vmatprep.subr.bf16.mxu0 0
        %1391 = vmatpush1.bf16.xpose.msra.mxu0 0
        %1392 = vmatprep.subr.bf16.mxu0 0
        %1393 = vmatpush1.bf16.xpose.msra.mxu0 0
        %1394 = vmatprep.subr.bf16.mxu0 0
        %1395 = vmatpush1.bf16.xpose.msra.mxu0 0
        %1396 = vmatprep.subr.bf16.mxu0 0
        %1397 = vmatpush1.bf16.xpose.msra.mxu0 0
        %1398 = vmatprep.subr.bf16.mxu0 0
        %1399 = vmatpush1.bf16.xpose.msra.mxu0 0
        %1400 = vmatprep.mubr.bf16.mxu0 0
        %1401 = vmatmul.mubr.bf16.gmra.mrb[0].mxu0 %v1363
        %v1402 = vpop.f32.mrb[0].mxu0
        %v1403 = vadd.f32 0.0, %v1402
        %v1404 = vpop.f32.mrb[0].mxu0
        %v1405 = vpop.f32.mrb[0].mxu0
        %v1406 = vpop.f32.mrb[0].mxu0
        %1407 = vdwg.mxu0
        %v1408 = vmul.f32 %v1353, 0.25
        %v1409 = vmul.f32 %v1403, 0.25
        %v1410 = vadd.f32 %v1408, %v1175
        %v1411 = vadd.f32 %v1409, %v1179
        %v1412 = vsel %vm1184, %v1410, -inf
        %1413 = vmax.xlane.f32.xlu0 %v1412
        %v1414 = vpop.xlane.xlu0 %1413
        %v1415 = vsel %vm1184, %v1411, -inf
        %1416 = vmax.xlane.f32.xlu0 %v1415
        %v1417 = vpop.xlane.xlu0 %1416
        %v1418 = vsub.f32 %v1410, %v1414
        %v1419 = vsub.f32 %v1411, %v1417
        %v1420 = vmul.f32 %v1418, 1.442695
        %v1421 = vpow.pop %v1420
        %v1422 = vmul.f32 %v1419, 1.442695
        %v1423 = vpow.pop %v1422
        %v1424 = vsel %vm1184, %v1421, 0.0
        %1425 = vadd.xlane.f32.xlu0 %v1424
        %v1426 = vpop.xlane.xlu0 %1425
        %v1427 = vsel %vm1184, %v1423, 0.0
        %1428 = vadd.xlane.f32.xlu0 %v1427
        %v1429 = vpop.xlane.xlu0 %1428
        %v1430 = vrcp.pop %v1426
        %v1431 = vrcp.pop %v1429
        %v1432 = vmul.f32 %v1421, %v1430
        %v1433 = vmul.f32 %v1423, %v1431
        %v1434 = vpack.c.bf16 %v1432, %v1432
        %v1435 = vpack.c.bf16 %v1433, %v1433
        %1436 = vrot.lane.b32.xlu0 %v1067, 48
        %v1437 = vpop.permute.xlu0 %1436
        %v1439 = vsel %vm1184, %v1434, 0
        %v1442 = vsel %vm1214, %v1437, 0
        %1444 = vmatprep.subr.bf16.mxu0 0
        %1445 = vmatpush1.bf16.msra.mxu0 %v1442
        %1446 = vmatprep.subr.bf16.mxu0 0
        %1447 = vmatpush1.bf16.msra.mxu0 0
        %1448 = vmatprep.subr.bf16.mxu0 0
        %1449 = vmatpush1.bf16.msra.mxu0 0
        %1450 = vmatprep.subr.bf16.mxu0 0
        %1451 = vmatpush1.bf16.msra.mxu0 0
        %1452 = vmatprep.subr.bf16.mxu0 0
        %1453 = vmatpush1.bf16.msra.mxu0 0
        %1454 = vmatprep.subr.bf16.mxu0 0
        %1455 = vmatpush1.bf16.msra.mxu0 0
        %1456 = vmatprep.subr.bf16.mxu0 0
        %1457 = vmatpush1.bf16.msra.mxu0 0
        %1458 = vmatprep.subr.bf16.mxu0 0
        %1459 = vmatpush1.bf16.msra.mxu0 0
        %1460 = vmatprep.subr.bf16.mxu0 0
        %1461 = vmatpush1.bf16.msra.mxu0 0
        %1462 = vmatprep.subr.bf16.mxu0 0
        %1463 = vmatpush1.bf16.msra.mxu0 0
        %1464 = vmatprep.subr.bf16.mxu0 0
        %1465 = vmatpush1.bf16.msra.mxu0 0
        %1466 = vmatprep.subr.bf16.mxu0 0
        %1467 = vmatpush1.bf16.msra.mxu0 0
        %1468 = vmatprep.subr.bf16.mxu0 0
        %1469 = vmatpush1.bf16.msra.mxu0 0
        %1470 = vmatprep.subr.bf16.mxu0 0
        %1471 = vmatpush1.bf16.msra.mxu0 0
        %1472 = vmatprep.subr.bf16.mxu0 0
        %1473 = vmatpush1.bf16.msra.mxu0 0
        %1474 = vmatprep.subr.bf16.mxu0 0
        %1475 = vmatpush1.bf16.msra.mxu0 0
        %1476 = vmatprep.mubr.bf16.mxu0 0
        %1477 = vmatmul.mubr.bf16.gmra.mrb[0].mxu0 %v1439
        %v1478 = vpop.f32.mrb[0].mxu0
        %v1479 = vadd.f32 0.0, %v1478
        %v1480 = vpop.f32.mrb[0].mxu0
        %v1481 = vpop.f32.mrb[0].mxu0
        %v1482 = vpop.f32.mrb[0].mxu0
        %1483 = vdwg.mxu0
        %1484 = vrot.lane.b32.xlu0 %v1068, 48
        %v1485 = vpop.permute.xlu0 %1484
        %v1487 = vsel %vm1184, %v1435, 0
        %v1490 = vsel %vm1214, %v1485, 0
        %1492 = vmatprep.subr.bf16.mxu0 0
        %1493 = vmatpush1.bf16.msra.mxu0 %v1490
        %1494 = vmatprep.subr.bf16.mxu0 0
        %1495 = vmatpush1.bf16.msra.mxu0 0
        %1496 = vmatprep.subr.bf16.mxu0 0
        %1497 = vmatpush1.bf16.msra.mxu0 0
        %1498 = vmatprep.subr.bf16.mxu0 0
        %1499 = vmatpush1.bf16.msra.mxu0 0
        %1500 = vmatprep.subr.bf16.mxu0 0
        %1501 = vmatpush1.bf16.msra.mxu0 0
        %1502 = vmatprep.subr.bf16.mxu0 0
        %1503 = vmatpush1.bf16.msra.mxu0 0
        %1504 = vmatprep.subr.bf16.mxu0 0
        %1505 = vmatpush1.bf16.msra.mxu0 0
        %1506 = vmatprep.subr.bf16.mxu0 0
        %1507 = vmatpush1.bf16.msra.mxu0 0
        %1508 = vmatprep.subr.bf16.mxu0 0
        %1509 = vmatpush1.bf16.msra.mxu0 0
        %1510 = vmatprep.subr.bf16.mxu0 0
        %1511 = vmatpush1.bf16.msra.mxu0 0
        %1512 = vmatprep.subr.bf16.mxu0 0
        %1513 = vmatpush1.bf16.msra.mxu0 0
        %1514 = vmatprep.subr.bf16.mxu0 0
        %1515 = vmatpush1.bf16.msra.mxu0 0
        %1516 = vmatprep.subr.bf16.mxu0 0
        %1517 = vmatpush1.bf16.msra.mxu0 0
        %1518 = vmatprep.subr.bf16.mxu0 0
        %1519 = vmatpush1.bf16.msra.mxu0 0
        %1520 = vmatprep.subr.bf16.mxu0 0
        %1521 = vmatpush1.bf16.msra.mxu0 0
        %1522 = vmatprep.subr.bf16.mxu0 0
        %1523 = vmatpush1.bf16.msra.mxu0 0
        %1524 = vmatprep.mubr.bf16.mxu0 0
        %1525 = vmatmul.mubr.bf16.gmra.mrb[0].mxu0 %v1487
        %v1526 = vpop.f32.mrb[0].mxu0
        %v1527 = vadd.f32 0.0, %v1526
        %v1528 = vpop.f32.mrb[0].mxu0
        %v1529 = vpop.f32.mrb[0].mxu0
        %v1530 = vpop.f32.mrb[0].mxu0
        %1531 = vdwg.mxu0
        %1534 = vrot.lane.b32.xlu0 %v1479, 16
        %v1535 = vpop.permute.xlu0 %1534
        %1536 = vrot.lane.b32.xlu0 %v1527, 16
        %v1537 = vpop.permute.xlu0 %1536
        %vm1540 = vcmask 261248
        %1541 = vst.msk [vmem:[#allocation2] sm:$0xff] %vm1540, %v1535
        %1542 = vst.msk [vmem:[#allocation2 + $0x8] sm:$0xff] %vm1540, %v1537
        %v1543 = vld [vmem:[#allocation2] sm:$0xff]
        %v1544 = vld [vmem:[#allocation2 + $0x8] sm:$0xff]
        %v1545 = vpack.c.bf16 %v1544, %v1543
        %v1546 = vld [vmem:[%s774] sm:$0xf]
        %v1547 = vld [vmem:[%s774 + $0x4] sm:$0xf]
        %v1548 = vld [vmem:[%s774 + $0x8] sm:$0xf]
        %v1549 = vld [vmem:[%s774 + $0xc] sm:$0xf]
        %v1550 = vld [vmem:[%s782] sm:$0x1]
        %v1552 = vlaneseq
        %v1553 = vshrl.u32 %v1552, 7
        %v1554 = vsub.s32 0, %v1553
        %v1555 = vrot.slane %v1550, %v1554
        %v1561 = vunpack.c.l.b16 %v1546
        %v1562 = vunpack.c.l.b16 %v1547
        %v1563 = vunpack.c.l.b16 %v1548
        %v1564 = vunpack.c.l.b16 %v1549
        %v1565 = vpack.c.b16 %v1562, %v1561
        %v1566 = vpack.c.b16 %v1564, %v1563
        %v1570 = vsel %vm1022, %v1545, 0
        %1572 = vmatprep.subr.bf16.mxu0 0
        %1573 = vmatpush1.bf16.msra.mxu0 %v1565
        %1574 = vmatprep.subr.bf16.mxu0 0
        %1575 = vmatpush1.bf16.msra.mxu0 %v1566
        %1576 = vmatprep.subr.bf16.mxu0 0
        %1577 = vmatpush1.bf16.msra.mxu0 0
        %1578 = vmatprep.subr.bf16.mxu0 0
        %1579 = vmatpush1.bf16.msra.mxu0 0
        %1580 = vmatprep.subr.bf16.mxu0 0
        %1581 = vmatpush1.bf16.msra.mxu0 0
        %1582 = vmatprep.subr.bf16.mxu0 0
        %1583 = vmatpush1.bf16.msra.mxu0 0
        %1584 = vmatprep.subr.bf16.mxu0 0
        %1585 = vmatpush1.bf16.msra.mxu0 0
        %1586 = vmatprep.subr.bf16.mxu0 0
        %1587 = vmatpush1.bf16.msra.mxu0 0
        %1588 = vmatprep.subr.bf16.mxu0 0
        %1589 = vmatpush1.bf16.msra.mxu0 0
        %1590 = vmatprep.subr.bf16.mxu0 0
        %1591 = vmatpush1.bf16.msra.mxu0 0
        %1592 = vmatprep.subr.bf16.mxu0 0
        %1593 = vmatpush1.bf16.msra.mxu0 0
        %1594 = vmatprep.subr.bf16.mxu0 0
        %1595 = vmatpush1.bf16.msra.mxu0 0
        %1596 = vmatprep.subr.bf16.mxu0 0
        %1597 = vmatpush1.bf16.msra.mxu0 0
        %1598 = vmatprep.subr.bf16.mxu0 0
        %1599 = vmatpush1.bf16.msra.mxu0 0
        %1600 = vmatprep.subr.bf16.mxu0 0
        %1601 = vmatpush1.bf16.msra.mxu0 0
        %1602 = vmatprep.subr.bf16.mxu0 0
        %1603 = vmatpush1.bf16.msra.mxu0 0
        %1604 = vmatprep.mubr.bf16.mxu0 0
        %1605 = vmatmul.mubr.bf16.gmra.mrb[0].mxu0 %v1570
        %v1606 = vpop.f32.mrb[0].mxu0
        %v1607 = vadd.f32 %v1555, %v1606
        %v1608 = vpop.f32.mrb[0].mxu0
        %v1609 = vpop.f32.mrb[0].mxu0
        %v1610 = vadd.f32 %v1555, %v1609
        %v1611 = vpop.f32.mrb[0].mxu0
        %1612 = vdwg.mxu0
        %v1613 = vadd.f32 %v994, %v1607
        %v1614 = vadd.f32 %v995, %v1610
        %v1615 = vld [vmem:[%s790] sm:$0x1]
        %v1616 = vld [vmem:[%s798] sm:$0x1]
        %v1617 = vsel %vm1022, %v1613, 0.0
        %1618 = vadd.xlane.f32.xlu0 %v1617
        %v1619 = vpop.xlane.xlu0 %1618
        %v1620 = vsel %vm1022, %v1614, 0.0
        %1621 = vadd.xlane.f32.xlu0 %v1620
        %v1622 = vpop.xlane.xlu0 %1621
        %v1623 = vrcp.pop 32.0
        %v1624 = vmul.f32 %v1619, %v1623
        %v1625 = vmul.f32 %v1622, %v1623
        %v1626 = vsub.f32 %v1613, %v1624
        %v1627 = vsub.f32 %v1614, %v1625
        %v1628 = vmul.f32 %v1626, %v1626
        %v1629 = vmul.f32 %v1627, %v1627
        %v1630 = vsel %vm1022, %v1628, 0.0
        %1631 = vadd.xlane.f32.xlu0 %v1630
        %v1632 = vpop.xlane.xlu0 %1631
        %v1633 = vsel %vm1022, %v1629, 0.0
        %1634 = vadd.xlane.f32.xlu0 %v1633
        %v1635 = vpop.xlane.xlu0 %1634
        %v1636 = vmul.f32 %v1632, %v1623
        %v1637 = vmul.f32 %v1635, %v1623
        %v1638 = vadd.f32 %v1636, 1e-12
        %v1639 = vadd.f32 %v1637, 1e-12
        %v1640 = vrsqrt.pop %v1638
        %v1641 = vrsqrt.pop %v1639
        %v1642 = vmul.f32 %v1626, %v1640
        %v1643 = vmul.f32 %v1627, %v1641
        %v1645 = vlaneseq
        %v1646 = vshrl.u32 %v1645, 7
        %v1647 = vsub.s32 0, %v1646
        %v1648 = vrot.slane %v1615, %v1647
        %v1650 = vmul.f32 %v1642, %v1648
        %v1651 = vmul.f32 %v1643, %v1648
        %v1653 = vlaneseq
        %v1654 = vshrl.u32 %v1653, 7
        %v1655 = vsub.s32 0, %v1654
        %v1656 = vrot.slane %v1616, %v1655
        %v1658 = vadd.f32 %v1650, %v1656
        %v1659 = vadd.f32 %v1651, %v1656
        %v1660 = vpack.c.bf16 %v1659, %v1658
        %v1661 = vld [vmem:[%s807] sm:$0xf]
        %v1662 = vld [vmem:[%s807 + $0x4] sm:$0xf]
        %v1663 = vld [vmem:[%s807 + $0x8] sm:$0xf]
        %v1664 = vld [vmem:[%s807 + $0xc] sm:$0xf]
        %v1665 = vld [vmem:[%s815] sm:$0x1]
        %v1667 = vlaneseq
        %v1668 = vshrl.u32 %v1667, 7
        %v1669 = vsub.s32 0, %v1668
        %v1670 = vrot.slane %v1665, %v1669
        %v1676 = vunpack.c.l.b16 %v1661
        %v1677 = vunpack.c.l.b16 %v1662
        %v1678 = vunpack.c.l.b16 %v1663
        %v1679 = vunpack.c.l.b16 %v1664
        %v1680 = vpack.c.b16 %v1677, %v1676
        %v1681 = vpack.c.b16 %v1679, %v1678
        %v1685 = vsel %vm1022, %v1660, 0
        %1687 = vmatprep.subr.bf16.mxu0 0
        %1688 = vmatpush1.bf16.msra.mxu0 %v1680
        %1689 = vmatprep.subr.bf16.mxu0 0
        %1690 = vmatpush1.bf16.msra.mxu0 %v1681
        %1691 = vmatprep.subr.bf16.mxu0 0
        %1692 = vmatpush1.bf16.msra.mxu0 0
        %1693 = vmatprep.subr.bf16.mxu0 0
        %1694 = vmatpush1.bf16.msra.mxu0 0
        %1695 = vmatprep.subr.bf16.mxu0 0
        %1696 = vmatpush1.bf16.msra.mxu0 0
        %1697 = vmatprep.subr.bf16.mxu0 0
        %1698 = vmatpush1.bf16.msra.mxu0 0
        %1699 = vmatprep.subr.bf16.mxu0 0
        %1700 = vmatpush1.bf16.msra.mxu0 0
        %1701 = vmatprep.subr.bf16.mxu0 0
        %1702 = vmatpush1.bf16.msra.mxu0 0
        %1703 = vmatprep.subr.bf16.mxu0 0
        %1704 = vmatpush1.bf16.msra.mxu0 0
        %1705 = vmatprep.subr.bf16.mxu0 0
        %1706 = vmatpush1.bf16.msra.mxu0 0
        %1707 = vmatprep.subr.bf16.mxu0 0
        %1708 = vmatpush1.bf16.msra.mxu0 0
        %1709 = vmatprep.subr.bf16.mxu0 0
        %1710 = vmatpush1.bf16.msra.mxu0 0
        %1711 = vmatprep.subr.bf16.mxu0 0
        %1712 = vmatpush1.bf16.msra.mxu0 0
        %1713 = vmatprep.subr.bf16.mxu0 0
        %1714 = vmatpush1.bf16.msra.mxu0 0
        %1715 = vmatprep.subr.bf16.mxu0 0
        %1716 = vmatpush1.bf16.msra.mxu0 0
        %1717 = vmatprep.subr.bf16.mxu0 0
        %1718 = vmatpush1.bf16.msra.mxu0 0
        %1719 = vmatprep.mubr.bf16.mxu0 0
        %1720 = vmatmul.mubr.bf16.gmra.mrb[0].mxu0 %v1685
        %v1721 = vpop.f32.mrb[0].mxu0
        %v1722 = vadd.f32 %v1670, %v1721
        %v1723 = vpop.f32.mrb[0].mxu0
        %v1724 = vpop.f32.mrb[0].mxu0
        %v1725 = vadd.f32 %v1670, %v1724
        %v1726 = vpop.f32.mrb[0].mxu0
        %1727 = vdwg.mxu0
        %v1728 = vmul.f32 %v1722, %v1722
        %v1729 = vmul.f32 %v1725, %v1725
        %v1730 = vmul.f32 %v1722, %v1728
        %v1731 = vmul.f32 %v1725, %v1729
        %v1732 = vmul.f32 %v1730, 0.044715
        %v1733 = vmul.f32 %v1731, 0.044715
        %v1734 = vadd.f32 %v1722, %v1732
        %v1735 = vadd.f32 %v1725, %v1733
        %v1736 = vmul.f32 %v1734, 0.7978846
        %v1737 = vmul.f32 %v1735, 0.7978846
        %v1738 = vtanh.pop %v1736
        %v1739 = vtanh.pop %v1737
        %v1740 = vadd.f32 %v1738, 1.0
        %v1741 = vadd.f32 %v1739, 1.0
        %v1742 = vmul.f32 %v1740, 0.5
        %v1743 = vmul.f32 %v1741, 0.5
        %v1744 = vmul.f32 %v1722, %v1742
        %v1745 = vmul.f32 %v1725, %v1743
        %v1746 = vpack.c.bf16 %v1745, %v1744
        %v1747 = vld [vmem:[%s824] sm:$0xf]
        %v1748 = vld [vmem:[%s824 + $0x4] sm:$0xf]
        %v1749 = vld [vmem:[%s824 + $0x8] sm:$0xf]
        %v1750 = vld [vmem:[%s824 + $0xc] sm:$0xf]
        %v1751 = vld [vmem:[%s824 + $0x10] sm:$0xf]
        %v1752 = vld [vmem:[%s824 + $0x14] sm:$0xf]
        %v1753 = vld [vmem:[%s824 + $0x18] sm:$0xf]
        %v1754 = vld [vmem:[%s824 + $0x1c] sm:$0xf]
        %v1755 = vld [vmem:[%s832] sm:$0x1]
        %v1757 = vlaneseq
        %v1758 = vshrl.u32 %v1757, 7
        %v1759 = vsub.s32 0, %v1758
        %v1760 = vrot.slane %v1755, %v1759
        %v1770 = vunpack.c.l.b16 %v1747
        %v1771 = vunpack.c.l.b16 %v1748
        %v1772 = vunpack.c.l.b16 %v1749
        %v1773 = vunpack.c.l.b16 %v1750
        %v1774 = vunpack.c.l.b16 %v1751
        %v1775 = vunpack.c.l.b16 %v1752
        %v1776 = vunpack.c.l.b16 %v1753
        %v1777 = vunpack.c.l.b16 %v1754
        %v1778 = vpack.c.b16 %v1771, %v1770
        %v1779 = vpack.c.b16 %v1773, %v1772
        %v1780 = vpack.c.b16 %v1775, %v1774
        %v1781 = vpack.c.b16 %v1777, %v1776
        %vm1786 = vcmask 523264
        %v1788 = vsel %vm1786, %v1746, 0
        %1790 = vmatprep.subr.bf16.mxu0 0
        %1791 = vmatpush1.bf16.msra.mxu0 %v1778
        %1792 = vmatprep.subr.bf16.mxu0 0
        %1793 = vmatpush1.bf16.msra.mxu0 %v1779
        %1794 = vmatprep.subr.bf16.mxu0 0
        %1795 = vmatpush1.bf16.msra.mxu0 %v1780
        %1796 = vmatprep.subr.bf16.mxu0 0
        %1797 = vmatpush1.bf16.msra.mxu0 %v1781
        %1798 = vmatprep.subr.bf16.mxu0 0
        %1799 = vmatpush1.bf16.msra.mxu0 0
        %1800 = vmatprep.subr.bf16.mxu0 0
        %1801 = vmatpush1.bf16.msra.mxu0 0
        %1802 = vmatprep.subr.bf16.mxu0 0
        %1803 = vmatpush1.bf16.msra.mxu0 0
        %1804 = vmatprep.subr.bf16.mxu0 0
        %1805 = vmatpush1.bf16.msra.mxu0 0
        %1806 = vmatprep.subr.bf16.mxu0 0
        %1807 = vmatpush1.bf16.msra.mxu0 0
        %1808 = vmatprep.subr.bf16.mxu0 0
        %1809 = vmatpush1.bf16.msra.mxu0 0
        %1810 = vmatprep.subr.bf16.mxu0 0
        %1811 = vmatpush1.bf16.msra.mxu0 0
        %1812 = vmatprep.subr.bf16.mxu0 0
        %1813 = vmatpush1.bf16.msra.mxu0 0
        %1814 = vmatprep.subr.bf16.mxu0 0
        %1815 = vmatpush1.bf16.msra.mxu0 0
        %1816 = vmatprep.subr.bf16.mxu0 0
        %1817 = vmatpush1.bf16.msra.mxu0 0
        %1818 = vmatprep.subr.bf16.mxu0 0
        %1819 = vmatpush1.bf16.msra.mxu0 0
        %1820 = vmatprep.subr.bf16.mxu0 0
        %1821 = vmatpush1.bf16.msra.mxu0 0
        %1822 = vmatprep.mubr.bf16.mxu0 0
        %1823 = vmatmul.mubr.bf16.gmra.mrb[0].mxu0 %v1788
        %v1824 = vpop.f32.mrb[0].mxu0
        %v1825 = vadd.f32 %v1760, %v1824
        %v1826 = vpop.f32.mrb[0].mxu0
        %v1827 = vpop.f32.mrb[0].mxu0
        %v1828 = vadd.f32 %v1760, %v1827
        %v1829 = vpop.f32.mrb[0].mxu0
        %1830 = vdwg.mxu0
        %v1831 = vadd.f32 %v1658, %v1825
        %v1832 = vadd.f32 %v1659, %v1828
        %v1833 = vld [vmem:[%s840] sm:$0x1]
        %v1834 = vld [vmem:[%s848] sm:$0x1]
        %v1835 = vsel %vm1022, %v1831, 0.0
        %1836 = vadd.xlane.f32.xlu0 %v1835
        %v1837 = vpop.xlane.xlu0 %1836
        %v1838 = vsel %vm1022, %v1832, 0.0
        %1839 = vadd.xlane.f32.xlu0 %v1838
        %v1840 = vpop.xlane.xlu0 %1839
        %v1841 = vmul.f32 %v1837, %v1623
        %v1842 = vmul.f32 %v1840, %v1623
        %v1843 = vsub.f32 %v1831, %v1841
        %v1844 = vsub.f32 %v1832, %v1842
        %v1845 = vmul.f32 %v1843, %v1843
        %v1846 = vmul.f32 %v1844, %v1844
        %v1847 = vsel %vm1022, %v1845, 0.0
        %1848 = vadd.xlane.f32.xlu0 %v1847
        %v1849 = vpop.xlane.xlu0 %1848
        %v1850 = vsel %vm1022, %v1846, 0.0
        %1851 = vadd.xlane.f32.xlu0 %v1850
        %v1852 = vpop.xlane.xlu0 %1851
        %v1853 = vmul.f32 %v1849, %v1623
        %v1854 = vmul.f32 %v1852, %v1623
        %v1855 = vadd.f32 %v1853, 1e-12
        %v1856 = vadd.f32 %v1854, 1e-12
        %v1857 = vrsqrt.pop %v1855
        %v1858 = vrsqrt.pop %v1856
        %v1859 = vmul.f32 %v1843, %v1857
        %v1860 = vmul.f32 %v1844, %v1858
        %v1862 = vlaneseq
        %v1863 = vshrl.u32 %v1862, 7
        %v1864 = vsub.s32 0, %v1863
        %v1865 = vrot.slane %v1833, %v1864
        %v1867 = vmul.f32 %v1859, %v1865
        %v1868 = vmul.f32 %v1860, %v1865
        %v1870 = vlaneseq
        %v1871 = vshrl.u32 %v1870, 7
        %v1872 = vsub.s32 0, %v1871
        %v1873 = vrot.slane %v1834, %v1872
        %v1875 = vadd.f32 %v1867, %v1873
        %v1876 = vadd.f32 %v1868, %v1873
        %1877 = vst.msk [vmem:[#allocation23] sm:$0xff] %vm1022, %v1875
        %1878 = vst.msk [vmem:[#allocation23 + $0x8] sm:$0xff] %vm1022, %v1876
        // Predicated region
        $region153: #{tpu_custom_call.1} parent=83 // pred_check
          %p1879 = pneg %p440
        $region154: #{tpu_custom_call.1} parent=83 // pred_check_branch
          %1881 = sbr.rel (%p1879) target = $region156
        $region155: #{tpu_custom_call.1} parent=83 // pred_region
          %s1883 = ssub.s32 256, 256
          %1884 = vsyncadd [#allocation5], %s1883
          %s1885 = sshll.u32 [#allocation23], 4
          %s1886 = int_to_ptr.vmem [resolvable:$true] %s1885
          %1891 = dma.vmem_to_hbm [thread:$0]  %s1886, 256, %s16, [#allocation5], 128, 128, 8
        $region156: #{tpu_custom_call.1} parent=83 // pred_fallthru
          _
        // Predicated region
        $region157: #{tpu_custom_call.1} parent=83 // pred_check
          %p1892 = pneg %p440
        $region158: #{tpu_custom_call.1} parent=83 // pred_check_branch
          %1894 = sbr.rel (%p1892) target = $region160
        $region159: #{tpu_custom_call.1} parent=83 // pred_region
          %1895 = dma.done [#allocation5], 256
        $region160: #{tpu_custom_call.1} parent=83 // pred_fallthru
          _
      $region84: #{tpu_custom_call.1} parent=5 // pred_fallthru
        _
      %p1896 = scmp.le.s32.totalorder 2, %s26
      // Predicated region
      $region161: #{tpu_custom_call.1} parent=5 // pred_check
        %p1897 = pneg %p1896
      $region162: #{tpu_custom_call.1} parent=5 // pred_check_branch
        %1899 = sbr.rel (%p1897) target = $region164
      $region163: #{tpu_custom_call.1} parent=5 // pred_region
        %s1900 = ssub.s32 %s26, 2
      $region164: #{tpu_custom_call.1} parent=5 // pred_fallthru
        _
    $region6: #{tpu_custom_call.1} parent=1 // loop_footer
      %s30 = sadd.s32 1, %s26
    $region7: #{tpu_custom_call.1} parent=1 // loop_footer_branch
      %25 = sbr.rel target = $region3
    $region8: #{tpu_custom_call.1} parent=1 // loop_exit
      _
    %1901 = vsyncpa [#allocation4], 1
    %s1902 = scalar_lea.sflag [#allocation4], 1
    %1903 = vsyncpa %s1902, 1
    %1904 = vsyncpa [#allocation7], 1
    %1905 = vsyncpa [#allocation10], 1
    %1906 = vsyncpa [#allocation5], 1
    %s1907 = scalar_lea.sflag [#allocation5], 1
    %1908 = vsyncpa %s1907, 1

</llo_original>
